<compile_context>
chip_gen: v7x
topology: tpu7x:2x2x1
jax: 0.10.0
libtpu: 0.0.40
codegen_flags: <defaults>
</compile_context>

<pallas_src>
import math
from functools import partial

import jax
import jax.numpy as jnp
from jax.experimental import pallas as pl
from jax.experimental.pallas import tpu as pltpu


# ---------------------------------------------------------------------------
# in-kernel helpers (traced inside pallas kernels)
# ---------------------------------------------------------------------------
def _layernorm(x, w, b, eps=1e-5):
    # x: (T, C) f32, w/b: (1, C) f32
    mu = jnp.mean(x, axis=-1, keepdims=True)
    var = jnp.mean((x - mu) ** 2, axis=-1, keepdims=True)
    xhat = (x - mu) * jax.lax.rsqrt(var + eps)
    return xhat * w + b


def _gelu_tanh(x):
    # matches torch nn.GELU(approximate='tanh')
    c = math.sqrt(2.0 / math.pi)
    return 0.5 * x * (1.0 + jnp.tanh(c * (x + 0.044715 * x * x * x)))


def _dot_nt(a, b):
    # a @ b.T without materializing the transpose; f32 accumulation
    return jax.lax.dot_general(a, b, (((1,), (1,)), ((), ())),
                               preferred_element_type=jnp.float32)


# ---------------------------------------------------------------------------
# fused transformer-blocks kernel
# grid = (B, n_layer): batch is "parallel", layer axis is the sequential
# (accumulator) axis.  The residual stream lives in out_ref across layers.
# ---------------------------------------------------------------------------
def gpt_blocks_kernel(x_ref,
                      ln1w_ref, ln1b_ref, wqkv_ref, bqkv_ref, wpr_ref, bpr_ref,
                      ln2w_ref, ln2b_ref, wfc_ref, bfc_ref, wp2_ref, bp2_ref,
                      out_ref,
                      q_s, k_s, v_s,
                      *, n_head):
    layer = pl.program_id(1)

    @pl.when(layer == 0)
    def _():
        out_ref[0] = x_ref[0]          # seed the residual stream

    x = out_ref[0]                      # (T, C) f32
    T, C = x.shape
    D = C // n_head
    scale = 1.0 / math.sqrt(D)

    # ----- causal self attention -----
    h = _layernorm(x, ln1w_ref[0], ln1b_ref[0])
    qkv = jnp.dot(h.astype(jnp.bfloat16), wqkv_ref[0],
                  preferred_element_type=jnp.float32) + bqkv_ref[0]   # (T, 3C)

    # stage per-head q/k/v into (H, T, D) scratch; fold 1/sqrt(D) into q.
    for hd in range(n_head):            # static loop: data staging only
        q_s[hd] = (qkv[:, hd * D:(hd + 1) * D] * scale).astype(jnp.bfloat16)
        k_s[hd] = qkv[:, C + hd * D:C + (hd + 1) * D].astype(jnp.bfloat16)
        v_s[hd] = qkv[:, 2 * C + hd * D:2 * C + (hd + 1) * D].astype(jnp.bfloat16)

    row = jax.lax.broadcasted_iota(jnp.int32, (T, T), 0)
    col = jax.lax.broadcasted_iota(jnp.int32, (T, T), 1)
    causal = row >= col

    def head_body(hd, att):
        qh = q_s[hd]                                       # (T, D) bf16
        kh = k_s[hd]
        vh = v_s[hd]
        s = _dot_nt(qh, kh)                                # (T, T) f32
        s = jnp.where(causal, s, -jnp.inf)
        p = jnp.exp(s - jnp.max(s, axis=-1, keepdims=True))
        p = p * pl.reciprocal(jnp.sum(p, axis=-1, keepdims=True), approx=True)
        yh = jnp.dot(p.astype(jnp.bfloat16), vh,
                     preferred_element_type=jnp.float32)   # (T, D)
        # fold head output straight into c_proj (head-major weight slice):
        # avoids masked sub-128-lane stores into a (T, C) scratch.
        return att + jnp.dot(yh.astype(jnp.bfloat16), wpr_ref[0, hd],
                             preferred_element_type=jnp.float32)

    att = jax.lax.fori_loop(0, n_head, head_body,
                            jnp.zeros((T, C), jnp.float32))
    x = x + att + bpr_ref[0]

    # ----- MLP -----
    h2 = _layernorm(x, ln2w_ref[0], ln2b_ref[0])
    fc = jnp.dot(h2.astype(jnp.bfloat16), wfc_ref[0],
                 preferred_element_type=jnp.float32) + bfc_ref[0]
    fc = _gelu_tanh(fc)
    mlp = jnp.dot(fc.astype(jnp.bfloat16), wp2_ref[0],
                  preferred_element_type=jnp.float32) + bp2_ref[0]

    out_ref[0] = x + mlp


_BLOCK_WEIGHT_NAMES = ('ln1_w', 'ln1_b', 'w_qkv', 'b_qkv',
                       'w_attn_proj', 'b_attn_proj',
                       'ln2_w', 'ln2_b', 'w_fc', 'b_fc',
                       'w_mlp_proj', 'b_mlp_proj')


def _layer_spec(w):
    # per-layer weight: block = one layer's slab, streamed along the layer axis
    zeros = (0,) * (w.ndim - 1)
    return pl.BlockSpec((1,) + w.shape[1:], lambda b, l, zeros=zeros: (l,) + zeros)


def run_gpt_blocks(x, blocks, n_head):
    B, T, C = x.shape
    D = C // n_head
    weights = [blocks[name] for name in _BLOCK_WEIGHT_NAMES]
    L = weights[2].shape[0]             # w_qkv: (L, C, 3C)

    in_specs = [pl.BlockSpec((1, T, C), lambda b, l: (b, 0, 0))]
    in_specs += [_layer_spec(w) for w in weights]

    return pl.pallas_call(
        partial(gpt_blocks_kernel, n_head=n_head),
        out_shape=jax.ShapeDtypeStruct((B, T, C), jnp.float32),
        grid_spec=pltpu.PrefetchScalarGridSpec(
            num_scalar_prefetch=0,
            grid=(B, L),
            in_specs=in_specs,
            out_specs=pl.BlockSpec((1, T, C), lambda b, l: (b, 0, 0)),
            scratch_shapes=[pltpu.VMEM((n_head, T, D), jnp.bfloat16)] * 3,
        ),
        compiler_params=pltpu.CompilerParams(
            dimension_semantics=("parallel", "arbitrary"),
            # explicit budget with headroom; fits every generation's VMEM
            vmem_limit_bytes=64 * 1024 * 1024,
        ),
    )(x, *weights)


# ---------------------------------------------------------------------------
# final LayerNorm + lm_head (weight-tied to wte), tiled over the vocab dim
# grid = (B, V // tv)
# ---------------------------------------------------------------------------
def lm_head_kernel(x_ref, lnw_ref, lnb_ref, wte_t_ref, out_ref):
    h = _layernorm(x_ref[0], lnw_ref[...], lnb_ref[...])          # (T, C) f32
    out_ref[0] = jnp.dot(h.astype(jnp.bfloat16), wte_t_ref[...],
                         preferred_element_type=jnp.float32)      # (T, tv)


def _default_vocab_tile(V):
    for t in (4096, 2048, 1024, 512, 256, 128):
        if V % t == 0:
            return t
    return V


def run_lm_head(x, lnf_w, lnf_b, wte_t, tv=None):
    B, T, C = x.shape
    V = wte_t.shape[1]
    tv = tv or _default_vocab_tile(V)
    assert V % tv == 0 and (tv == V or tv % 128 == 0)

    return pl.pallas_call(
        lm_head_kernel,
        out_shape=jax.ShapeDtypeStruct((B, T, V), jnp.float32),
        grid_spec=pltpu.PrefetchScalarGridSpec(
            num_scalar_prefetch=0,
            grid=(B, V // tv),
            in_specs=[pl.BlockSpec((1, T, C), lambda b, v: (b, 0, 0)),
                      pl.BlockSpec(lnf_w.shape, lambda b, v: (0, 0)),
                      pl.BlockSpec(lnf_b.shape, lambda b, v: (0, 0)),
                      pl.BlockSpec((C, tv), lambda b, v: (0, v))],
            out_specs=pl.BlockSpec((1, T, tv), lambda b, v: (b, 0, v)),
        ),
        compiler_params=pltpu.CompilerParams(
            dimension_semantics=("parallel", "parallel"),
            vmem_limit_bytes=64 * 1024 * 1024,
        ),
    )(x, lnf_w, lnf_b, wte_t)


# ---------------------------------------------------------------------------
# parameter init (deterministic, mirrors GPT._init_weights)
# matmul weights are stored in bf16 (MXU-native); LN params / biases in f32.
# ---------------------------------------------------------------------------
def init_params(key, vocab_size, block_size, n_layer, n_head, n_embd):
    C = n_embd
    D = C // n_head
    std = 0.02
    proj_std = 0.02 * (2 * n_layer) ** -0.5   # NANOGPT_SCALE_INIT on attn.c_proj
    keys = jax.random.split(key, 2 + 4 * n_layer)

    wte = std * jax.random.normal(keys[0], (vocab_size, C), jnp.float32)
    wpe = std * jax.random.normal(keys[1], (block_size, C), jnp.float32)

    def make_layer(i):
        kq, kp, kf, km = keys[2 + 4 * i: 6 + 4 * i]
        return dict(
            ln1_w=jnp.ones((1, C), jnp.float32),
            ln1_b=jnp.zeros((1, C), jnp.float32),
            w_qkv=(std * jax.random.normal(kq, (C, 3 * C), jnp.float32)
                   ).astype(jnp.bfloat16),
            b_qkv=jnp.zeros((1, 3 * C), jnp.float32),
            # head-major (n_head, D, C): per-head slice is a leading-dim index
            w_attn_proj=(proj_std * jax.random.normal(kp, (C, C), jnp.float32)
                         ).reshape(n_head, D, C).astype(jnp.bfloat16),
            b_attn_proj=jnp.zeros((1, C), jnp.float32),
            ln2_w=jnp.ones((1, C), jnp.float32),
            ln2_b=jnp.zeros((1, C), jnp.float32),
            w_fc=(std * jax.random.normal(kf, (C, 4 * C), jnp.float32)
                  ).astype(jnp.bfloat16),
            b_fc=jnp.zeros((1, 4 * C), jnp.float32),
            w_mlp_proj=(std * jax.random.normal(km, (4 * C, C), jnp.float32)
                        ).astype(jnp.bfloat16),
            b_mlp_proj=jnp.zeros((1, C), jnp.float32),
        )

    layers = [make_layer(i) for i in range(n_layer)]
    blocks = {k: jnp.stack([lyr[k] for lyr in layers], axis=0)
              for k in _BLOCK_WEIGHT_NAMES}

    return {
        'wte': wte,                                   # (V, C) f32, embedding gather
        'wpe': wpe,                                   # (block_size, C) f32
        'wte_t': wte.T.astype(jnp.bfloat16),          # (C, V) bf16, tied lm_head
        'ln_f_w': jnp.ones((1, C), jnp.float32),
        'ln_f_b': jnp.zeros((1, C), jnp.float32),
        'blocks': blocks,
    }


# ---------------------------------------------------------------------------
# full GPT forward
# ---------------------------------------------------------------------------
def gpt_forward(params, idx, n_head, targets=None, lm_tile=None):
    B, T = idx.shape
    # glue: embedding gather + positional embedding (not the hot path)
    x = params['wte'][idx] + params['wpe'][:T][None, :, :]
    x = run_gpt_blocks(x, params['blocks'], n_head)
    logits = run_lm_head(x, params['ln_f_w'], params['ln_f_b'],
                         params['wte_t'], tv=lm_tile)
    loss = None
    if targets is not None:
        # glue: plain-JAX cross entropy (same semantics as F.cross_entropy)
        logp = jax.nn.log_softmax(logits.reshape(-1, logits.shape[-1]), axis=-1)
        loss = -jnp.mean(jnp.take_along_axis(
            logp, targets.reshape(-1, 1), axis=-1))
    return logits, loss


if __name__ == "__main__":
    # small config consistent with the module's forward
    vocab_size = 256
    block_size = 32
    n_layer = 2
    n_head = 4
    n_embd = 64
    B, T = 2, 16

    key = jax.random.PRNGKey(0)
    pkey, ikey = jax.random.split(key)
    params = init_params(pkey, vocab_size, block_size, n_layer, n_head, n_embd)
    idx = jax.random.randint(ikey, (B, T), 0, vocab_size, dtype=jnp.int32)

    # lm_tile=128 exercises the vocab-tiled lm_head grid (2 tiles of 128)
    logits, loss = gpt_forward(params, idx, n_head, lm_tile=128)
    logits = jax.block_until_ready(logits)

    assert logits.shape == (B, T, vocab_size)
    assert bool(jnp.all(jnp.isfinite(logits)))
    print("KERNEL_OK")
</pallas_src>

<mosaic_0001>
module attributes {stable_mosaic.version = 11 : i64} {
  func.func @gpt_blocks_kernel(%arg0: i32, %arg1: i32, %arg2: memref<1x16x64xf32, #tpu.memory_space<vmem>>, %arg3: memref<1x1x64xf32, #tpu.memory_space<vmem>>, %arg4: memref<1x1x64xf32, #tpu.memory_space<vmem>>, %arg5: memref<1x64x192xbf16, #tpu.memory_space<vmem>>, %arg6: memref<1x1x192xf32, #tpu.memory_space<vmem>>, %arg7: memref<1x4x16x64xbf16, #tpu.memory_space<vmem>>, %arg8: memref<1x1x64xf32, #tpu.memory_space<vmem>>, %arg9: memref<1x1x64xf32, #tpu.memory_space<vmem>>, %arg10: memref<1x1x64xf32, #tpu.memory_space<vmem>>, %arg11: memref<1x64x256xbf16, #tpu.memory_space<vmem>>, %arg12: memref<1x1x256xf32, #tpu.memory_space<vmem>>, %arg13: memref<1x256x64xbf16, #tpu.memory_space<vmem>>, %arg14: memref<1x1x64xf32, #tpu.memory_space<vmem>>, %arg15: memref<1x16x64xf32, #tpu.memory_space<vmem>>, %arg16: memref<4x16x16xbf16, #tpu.memory_space<vmem>>, %arg17: memref<4x16x16xbf16, #tpu.memory_space<vmem>>, %arg18: memref<4x16x16xbf16, #tpu.memory_space<vmem>>) attributes {dimension_semantics = [#tpu.dimension_semantics<parallel>, #tpu.dimension_semantics<arbitrary>], iteration_bounds = array<i64: 2, 2>, scalar_prefetch = 0 : i64, scratch_operands = 3 : i64, tpu.core_type = #tpu.core_type<tc>, window_params = [{transform_indices = @transform_0, window_bounds = array<i64: 1, 16, 64>}, {transform_indices = @transform_1, window_bounds = array<i64: 1, 1, 64>}, {transform_indices = @transform_2, window_bounds = array<i64: 1, 1, 64>}, {transform_indices = @transform_3, window_bounds = array<i64: 1, 64, 192>}, {transform_indices = @transform_4, window_bounds = array<i64: 1, 1, 192>}, {transform_indices = @transform_5, window_bounds = array<i64: 1, 4, 16, 64>}, {transform_indices = @transform_6, window_bounds = array<i64: 1, 1, 64>}, {transform_indices = @transform_7, window_bounds = array<i64: 1, 1, 64>}, {transform_indices = @transform_8, window_bounds = array<i64: 1, 1, 64>}, {transform_indices = @transform_9, window_bounds = array<i64: 1, 64, 256>}, {transform_indices = @transform_10, window_bounds = array<i64: 1, 1, 256>}, {transform_indices = @transform_11, window_bounds = array<i64: 1, 256, 64>}, {transform_indices = @transform_12, window_bounds = array<i64: 1, 1, 64>}, {transform_indices = @transform_13, window_bounds = array<i64: 1, 16, 64>}]} {
    %c0_i32 = arith.constant 0 : i32
    %0 = arith.cmpi eq, %arg1, %c0_i32 : i32
    %1 = arith.extui %0 : i1 to i32
    %c0_i32_0 = arith.constant 0 : i32
    %2 = arith.cmpi ne, %1, %c0_i32_0 : i32
    scf.if %2 {
      %c0_95 = arith.constant 0 : index
      %c0_96 = arith.constant 0 : index
      %c0_97 = arith.constant 0 : index
      %177 = vector.load %arg2[%c0_95, %c0_96, %c0_97] : memref<1x16x64xf32, #tpu.memory_space<vmem>>, vector<1x16x64xf32>
      %178 = vector.shape_cast %177 : vector<1x16x64xf32> to vector<16x64xf32>
      %c0_98 = arith.constant 0 : index
      %c0_99 = arith.constant 0 : index
      %c0_100 = arith.constant 0 : index
      %179 = vector.load %arg15[%c0_98, %c0_99, %c0_100] : memref<1x16x64xf32, #tpu.memory_space<vmem>>, vector<1x16x64xf32>
      %180 = vector.shape_cast %179 : vector<1x16x64xf32> to vector<16x64xf32>
      %181 = vector.shape_cast %178 : vector<16x64xf32> to vector<1x16x64xf32>
      tpu.vector_store %arg15[%c0_98, %c0_99, %c0_100], %181 {strides = array<i32>} : memref<1x16x64xf32, #tpu.memory_space<vmem>>, vector<1x16x64xf32>,
    } else {
    }
    %c0 = arith.constant 0 : index
    %c0_1 = arith.constant 0 : index
    %c0_2 = arith.constant 0 : index
    %3 = vector.load %arg15[%c0, %c0_1, %c0_2] : memref<1x16x64xf32, #tpu.memory_space<vmem>>, vector<1x16x64xf32>
    %4 = vector.shape_cast %3 : vector<1x16x64xf32> to vector<16x64xf32>
    %c0_3 = arith.constant 0 : index
    %c0_4 = arith.constant 0 : index
    %c0_5 = arith.constant 0 : index
    %5 = vector.load %arg3[%c0_3, %c0_4, %c0_5] : memref<1x1x64xf32, #tpu.memory_space<vmem>>, vector<1x1x64xf32>
    %6 = vector.shape_cast %5 : vector<1x1x64xf32> to vector<1x64xf32>
    %c0_6 = arith.constant 0 : index
    %c0_7 = arith.constant 0 : index
    %c0_8 = arith.constant 0 : index
    %7 = vector.load %arg4[%c0_6, %c0_7, %c0_8] : memref<1x1x64xf32, #tpu.memory_space<vmem>>, vector<1x1x64xf32>
    %8 = vector.shape_cast %7 : vector<1x1x64xf32> to vector<1x64xf32>
    %cst = arith.constant dense<0.000000e+00> : vector<16xf32>
    %9 = vector.multi_reduction <add>, %4, %cst [1] : vector<16x64xf32> to vector<16xf32>
    %10 = vector.shape_cast %9 : vector<16xf32> to vector<16x1xf32>
    %cst_9 = arith.constant 6.400000e+01 : f32
    %11 = vector.broadcast %cst_9 : f32 to vector<16x1xf32>
    %12 = arith.divf %10, %11 : vector<16x1xf32>
    %13 = vector.broadcast %12 : vector<16x1xf32> to vector<16x64xf32>
    %14 = arith.subf %4, %13 : vector<16x64xf32>
    %15 = arith.mulf %14, %14 : vector<16x64xf32>
    %cst_10 = arith.constant dense<0.000000e+00> : vector<16xf32>
    %16 = vector.multi_reduction <add>, %15, %cst_10 [1] : vector<16x64xf32> to vector<16xf32>
    %17 = vector.shape_cast %16 : vector<16xf32> to vector<16x1xf32>
    %cst_11 = arith.constant 6.400000e+01 : f32
    %18 = vector.broadcast %cst_11 : f32 to vector<16x1xf32>
    %19 = arith.divf %17, %18 : vector<16x1xf32>
    %20 = vector.broadcast %12 : vector<16x1xf32> to vector<16x64xf32>
    %21 = arith.subf %4, %20 : vector<16x64xf32>
    %cst_12 = arith.constant 9.99999974E-6 : f32
    %22 = vector.broadcast %cst_12 : f32 to vector<16x1xf32>
    %23 = arith.addf %19, %22 : vector<16x1xf32>
    %24 = math.rsqrt %23 : vector<16x1xf32>
    %25 = vector.broadcast %24 : vector<16x1xf32> to vector<16x64xf32>
    %26 = arith.mulf %21, %25 : vector<16x64xf32>
    %27 = vector.broadcast %6 : vector<1x64xf32> to vector<16x64xf32>
    %28 = arith.mulf %26, %27 : vector<16x64xf32>
    %29 = vector.broadcast %8 : vector<1x64xf32> to vector<16x64xf32>
    %30 = arith.addf %28, %29 : vector<16x64xf32>
    %31 = arith.truncf %30 : vector<16x64xf32> to vector<16x64xbf16>
    %c0_13 = arith.constant 0 : index
    %c0_14 = arith.constant 0 : index
    %c0_15 = arith.constant 0 : index
    %32 = vector.load %arg5[%c0_13, %c0_14, %c0_15] : memref<1x64x192xbf16, #tpu.memory_space<vmem>>, vector<1x64x192xbf16>
    %33 = vector.shape_cast %32 : vector<1x64x192xbf16> to vector<64x192xbf16>
    %cst_16 = arith.constant dense<0.000000e+00> : vector<16x192xf32>
    %34 = tpu.matmul %31, %33, %cst_16 {dimension_numbers = #tpu.dot_dimension_numbers<[1], [0], [0], [1], [0, 0, 1, 1], [], []>} : vector<16x64xbf16>, vector<64x192xbf16>, vector<16x192xf32> -> vector<16x192xf32>
    %c0_17 = arith.constant 0 : index
    %c0_18 = arith.constant 0 : index
    %c0_19 = arith.constant 0 : index
    %35 = vector.load %arg6[%c0_17, %c0_18, %c0_19] : memref<1x1x192xf32, #tpu.memory_space<vmem>>, vector<1x1x192xf32>
    %36 = vector.shape_cast %35 : vector<1x1x192xf32> to vector<1x192xf32>
    %37 = vector.broadcast %36 : vector<1x192xf32> to vector<16x192xf32>
    %38 = arith.addf %34, %37 : vector<16x192xf32>
    %39 = vector.extract_strided_slice %38 {offsets = [0, 0], sizes = [16, 16], strides = [1, 1]} : vector<16x192xf32> to vector<16x16xf32>
    %cst_20 = arith.constant 2.500000e-01 : f32
    %40 = vector.broadcast %cst_20 : f32 to vector<16x16xf32>
    %41 = arith.mulf %39, %40 : vector<16x16xf32>
    %42 = arith.truncf %41 : vector<16x16xf32> to vector<16x16xbf16>
    %c0_21 = arith.constant 0 : index
    %c0_22 = arith.constant 0 : index
    %c0_23 = arith.constant 0 : index
    %43 = vector.load %arg16[%c0_21, %c0_22, %c0_23] : memref<4x16x16xbf16, #tpu.memory_space<vmem>>, vector<1x16x16xbf16>
    %44 = vector.shape_cast %43 : vector<1x16x16xbf16> to vector<16x16xbf16>
    %45 = vector.shape_cast %42 : vector<16x16xbf16> to vector<1x16x16xbf16>
    tpu.vector_store %arg16[%c0_21, %c0_22, %c0_23], %45 {strides = array<i32>} : memref<4x16x16xbf16, #tpu.memory_space<vmem>>, vector<1x16x16xbf16>,
    %46 = vector.extract_strided_slice %38 {offsets = [0, 64], sizes = [16, 16], strides = [1, 1]} : vector<16x192xf32> to vector<16x16xf32>
    %47 = arith.truncf %46 : vector<16x16xf32> to vector<16x16xbf16>
    %c0_24 = arith.constant 0 : index
    %c0_25 = arith.constant 0 : index
    %c0_26 = arith.constant 0 : index
    %48 = vector.load %arg17[%c0_24, %c0_25, %c0_26] : memref<4x16x16xbf16, #tpu.memory_space<vmem>>, vector<1x16x16xbf16>
    %49 = vector.shape_cast %48 : vector<1x16x16xbf16> to vector<16x16xbf16>
    %50 = vector.shape_cast %47 : vector<16x16xbf16> to vector<1x16x16xbf16>
    tpu.vector_store %arg17[%c0_24, %c0_25, %c0_26], %50 {strides = array<i32>} : memref<4x16x16xbf16, #tpu.memory_space<vmem>>, vector<1x16x16xbf16>,
    %51 = vector.extract_strided_slice %38 {offsets = [0, 128], sizes = [16, 16], strides = [1, 1]} : vector<16x192xf32> to vector<16x16xf32>
    %52 = arith.truncf %51 : vector<16x16xf32> to vector<16x16xbf16>
    %c0_27 = arith.constant 0 : index
    %c0_28 = arith.constant 0 : index
    %c0_29 = arith.constant 0 : index
    %53 = vector.load %arg18[%c0_27, %c0_28, %c0_29] : memref<4x16x16xbf16, #tpu.memory_space<vmem>>, vector<1x16x16xbf16>
    %54 = vector.shape_cast %53 : vector<1x16x16xbf16> to vector<16x16xbf16>
    %55 = vector.shape_cast %52 : vector<16x16xbf16> to vector<1x16x16xbf16>
    tpu.vector_store %arg18[%c0_27, %c0_28, %c0_29], %55 {strides = array<i32>} : memref<4x16x16xbf16, #tpu.memory_space<vmem>>, vector<1x16x16xbf16>,
    %56 = vector.extract_strided_slice %38 {offsets = [0, 16], sizes = [16, 16], strides = [1, 1]} : vector<16x192xf32> to vector<16x16xf32>
    %cst_30 = arith.constant 2.500000e-01 : f32
    %57 = vector.broadcast %cst_30 : f32 to vector<16x16xf32>
    %58 = arith.mulf %56, %57 : vector<16x16xf32>
    %59 = arith.truncf %58 : vector<16x16xf32> to vector<16x16xbf16>
    %c1 = arith.constant 1 : index
    %c0_31 = arith.constant 0 : index
    %c0_32 = arith.constant 0 : index
    %60 = vector.load %arg16[%c1, %c0_31, %c0_32] : memref<4x16x16xbf16, #tpu.memory_space<vmem>>, vector<1x16x16xbf16>
    %61 = vector.shape_cast %60 : vector<1x16x16xbf16> to vector<16x16xbf16>
    %62 = vector.shape_cast %59 : vector<16x16xbf16> to vector<1x16x16xbf16>
    tpu.vector_store %arg16[%c1, %c0_31, %c0_32], %62 {strides = array<i32>} : memref<4x16x16xbf16, #tpu.memory_space<vmem>>, vector<1x16x16xbf16>,
    %63 = vector.extract_strided_slice %38 {offsets = [0, 80], sizes = [16, 16], strides = [1, 1]} : vector<16x192xf32> to vector<16x16xf32>
    %64 = arith.truncf %63 : vector<16x16xf32> to vector<16x16xbf16>
    %c1_33 = arith.constant 1 : index
    %c0_34 = arith.constant 0 : index
    %c0_35 = arith.constant 0 : index
    %65 = vector.load %arg17[%c1_33, %c0_34, %c0_35] : memref<4x16x16xbf16, #tpu.memory_space<vmem>>, vector<1x16x16xbf16>
    %66 = vector.shape_cast %65 : vector<1x16x16xbf16> to vector<16x16xbf16>
    %67 = vector.shape_cast %64 : vector<16x16xbf16> to vector<1x16x16xbf16>
    tpu.vector_store %arg17[%c1_33, %c0_34, %c0_35], %67 {strides = array<i32>} : memref<4x16x16xbf16, #tpu.memory_space<vmem>>, vector<1x16x16xbf16>,
    %68 = vector.extract_strided_slice %38 {offsets = [0, 144], sizes = [16, 16], strides = [1, 1]} : vector<16x192xf32> to vector<16x16xf32>
    %69 = arith.truncf %68 : vector<16x16xf32> to vector<16x16xbf16>
    %c1_36 = arith.constant 1 : index
    %c0_37 = arith.constant 0 : index
    %c0_38 = arith.constant 0 : index
    %70 = vector.load %arg18[%c1_36, %c0_37, %c0_38] : memref<4x16x16xbf16, #tpu.memory_space<vmem>>, vector<1x16x16xbf16>
    %71 = vector.shape_cast %70 : vector<1x16x16xbf16> to vector<16x16xbf16>
    %72 = vector.shape_cast %69 : vector<16x16xbf16> to vector<1x16x16xbf16>
    tpu.vector_store %arg18[%c1_36, %c0_37, %c0_38], %72 {strides = array<i32>} : memref<4x16x16xbf16, #tpu.memory_space<vmem>>, vector<1x16x16xbf16>,
    %73 = vector.extract_strided_slice %38 {offsets = [0, 32], sizes = [16, 16], strides = [1, 1]} : vector<16x192xf32> to vector<16x16xf32>
    %cst_39 = arith.constant 2.500000e-01 : f32
    %74 = vector.broadcast %cst_39 : f32 to vector<16x16xf32>
    %75 = arith.mulf %73, %74 : vector<16x16xf32>
    %76 = arith.truncf %75 : vector<16x16xf32> to vector<16x16xbf16>
    %c2 = arith.constant 2 : index
    %c0_40 = arith.constant 0 : index
    %c0_41 = arith.constant 0 : index
    %77 = vector.load %arg16[%c2, %c0_40, %c0_41] : memref<4x16x16xbf16, #tpu.memory_space<vmem>>, vector<1x16x16xbf16>
    %78 = vector.shape_cast %77 : vector<1x16x16xbf16> to vector<16x16xbf16>
    %79 = vector.shape_cast %76 : vector<16x16xbf16> to vector<1x16x16xbf16>
    tpu.vector_store %arg16[%c2, %c0_40, %c0_41], %79 {strides = array<i32>} : memref<4x16x16xbf16, #tpu.memory_space<vmem>>, vector<1x16x16xbf16>,
    %80 = vector.extract_strided_slice %38 {offsets = [0, 96], sizes = [16, 16], strides = [1, 1]} : vector<16x192xf32> to vector<16x16xf32>
    %81 = arith.truncf %80 : vector<16x16xf32> to vector<16x16xbf16>
    %c2_42 = arith.constant 2 : index
    %c0_43 = arith.constant 0 : index
    %c0_44 = arith.constant 0 : index
    %82 = vector.load %arg17[%c2_42, %c0_43, %c0_44] : memref<4x16x16xbf16, #tpu.memory_space<vmem>>, vector<1x16x16xbf16>
    %83 = vector.shape_cast %82 : vector<1x16x16xbf16> to vector<16x16xbf16>
    %84 = vector.shape_cast %81 : vector<16x16xbf16> to vector<1x16x16xbf16>
    tpu.vector_store %arg17[%c2_42, %c0_43, %c0_44], %84 {strides = array<i32>} : memref<4x16x16xbf16, #tpu.memory_space<vmem>>, vector<1x16x16xbf16>,
    %85 = vector.extract_strided_slice %38 {offsets = [0, 160], sizes = [16, 16], strides = [1, 1]} : vector<16x192xf32> to vector<16x16xf32>
    %86 = arith.truncf %85 : vector<16x16xf32> to vector<16x16xbf16>
    %c2_45 = arith.constant 2 : index
    %c0_46 = arith.constant 0 : index
    %c0_47 = arith.constant 0 : index
    %87 = vector.load %arg18[%c2_45, %c0_46, %c0_47] : memref<4x16x16xbf16, #tpu.memory_space<vmem>>, vector<1x16x16xbf16>
    %88 = vector.shape_cast %87 : vector<1x16x16xbf16> to vector<16x16xbf16>
    %89 = vector.shape_cast %86 : vector<16x16xbf16> to vector<1x16x16xbf16>
    tpu.vector_store %arg18[%c2_45, %c0_46, %c0_47], %89 {strides = array<i32>} : memref<4x16x16xbf16, #tpu.memory_space<vmem>>, vector<1x16x16xbf16>,
    %90 = vector.extract_strided_slice %38 {offsets = [0, 48], sizes = [16, 16], strides = [1, 1]} : vector<16x192xf32> to vector<16x16xf32>
    %cst_48 = arith.constant 2.500000e-01 : f32
    %91 = vector.broadcast %cst_48 : f32 to vector<16x16xf32>
    %92 = arith.mulf %90, %91 : vector<16x16xf32>
    %93 = arith.truncf %92 : vector<16x16xf32> to vector<16x16xbf16>
    %c3 = arith.constant 3 : index
    %c0_49 = arith.constant 0 : index
    %c0_50 = arith.constant 0 : index
    %94 = vector.load %arg16[%c3, %c0_49, %c0_50] : memref<4x16x16xbf16, #tpu.memory_space<vmem>>, vector<1x16x16xbf16>
    %95 = vector.shape_cast %94 : vector<1x16x16xbf16> to vector<16x16xbf16>
    %96 = vector.shape_cast %93 : vector<16x16xbf16> to vector<1x16x16xbf16>
    tpu.vector_store %arg16[%c3, %c0_49, %c0_50], %96 {strides = array<i32>} : memref<4x16x16xbf16, #tpu.memory_space<vmem>>, vector<1x16x16xbf16>,
    %97 = vector.extract_strided_slice %38 {offsets = [0, 112], sizes = [16, 16], strides = [1, 1]} : vector<16x192xf32> to vector<16x16xf32>
    %98 = arith.truncf %97 : vector<16x16xf32> to vector<16x16xbf16>
    %c3_51 = arith.constant 3 : index
    %c0_52 = arith.constant 0 : index
    %c0_53 = arith.constant 0 : index
    %99 = vector.load %arg17[%c3_51, %c0_52, %c0_53] : memref<4x16x16xbf16, #tpu.memory_space<vmem>>, vector<1x16x16xbf16>
    %100 = vector.shape_cast %99 : vector<1x16x16xbf16> to vector<16x16xbf16>
    %101 = vector.shape_cast %98 : vector<16x16xbf16> to vector<1x16x16xbf16>
    tpu.vector_store %arg17[%c3_51, %c0_52, %c0_53], %101 {strides = array<i32>} : memref<4x16x16xbf16, #tpu.memory_space<vmem>>, vector<1x16x16xbf16>,
    %102 = vector.extract_strided_slice %38 {offsets = [0, 176], sizes = [16, 16], strides = [1, 1]} : vector<16x192xf32> to vector<16x16xf32>
    %103 = arith.truncf %102 : vector<16x16xf32> to vector<16x16xbf16>
    %c3_54 = arith.constant 3 : index
    %c0_55 = arith.constant 0 : index
    %c0_56 = arith.constant 0 : index
    %104 = vector.load %arg18[%c3_54, %c0_55, %c0_56] : memref<4x16x16xbf16, #tpu.memory_space<vmem>>, vector<1x16x16xbf16>
    %105 = vector.shape_cast %104 : vector<1x16x16xbf16> to vector<16x16xbf16>
    %106 = vector.shape_cast %103 : vector<16x16xbf16> to vector<1x16x16xbf16>
    tpu.vector_store %arg18[%c3_54, %c0_55, %c0_56], %106 {strides = array<i32>} : memref<4x16x16xbf16, #tpu.memory_space<vmem>>, vector<1x16x16xbf16>,
    %107 = tpu.iota {dimensions = array<i32: 0>} : vector<16x16xi32>
    %108 = tpu.iota {dimensions = array<i32: 1>} : vector<16x16xi32>
    %109 = arith.cmpi sge, %107, %108 : vector<16x16xi32>
    %cst_57 = arith.constant 0.000000e+00 : f32
    %110 = vector.broadcast %cst_57 : f32 to vector<16x64xf32>
    %c0_i32_58 = arith.constant 0 : i32
    %c4_i32 = arith.constant 4 : i32
    %111 = arith.addi %c0_i32_58, %c4_i32 : i32
    %c1_i32 = arith.constant 1 : i32
    %112 = scf.for %arg19 = %c0_i32_58 to %111 step %c1_i32 iter_args(%arg20 = %110) -> (vector<16x64xf32>)  : i32 {
      %177 = arith.index_cast %arg19 : i32 to index
      %c0_95 = arith.constant 0 : index
      %c0_96 = arith.constant 0 : index
      %178 = vector.load %arg16[%177, %c0_95, %c0_96] : memref<4x16x16xbf16, #tpu.memory_space<vmem>>, vector<1x16x16xbf16>
      %179 = vector.shape_cast %178 : vector<1x16x16xbf16> to vector<16x16xbf16>
      %180 = arith.index_cast %arg19 : i32 to index
      %c0_97 = arith.constant 0 : index
      %c0_98 = arith.constant 0 : index
      %181 = vector.load %arg17[%180, %c0_97, %c0_98] : memref<4x16x16xbf16, #tpu.memory_space<vmem>>, vector<1x16x16xbf16>
      %182 = vector.shape_cast %181 : vector<1x16x16xbf16> to vector<16x16xbf16>
      %183 = arith.index_cast %arg19 : i32 to index
      %c0_99 = arith.constant 0 : index
      %c0_100 = arith.constant 0 : index
      %184 = vector.load %arg18[%183, %c0_99, %c0_100] : memref<4x16x16xbf16, #tpu.memory_space<vmem>>, vector<1x16x16xbf16>
      %185 = vector.shape_cast %184 : vector<1x16x16xbf16> to vector<16x16xbf16>
      %cst_101 = arith.constant dense<0.000000e+00> : vector<16x16xf32>
      %186 = tpu.matmul %179, %182, %cst_101 {dimension_numbers = #tpu.dot_dimension_numbers<[1], [1], [0], [0], [0, 0, 1, 0], [], []>} : vector<16x16xbf16>, vector<16x16xbf16>, vector<16x16xf32> -> vector<16x16xf32>
      %cst_102 = arith.constant 0xFF800000 : f32
      %187 = vector.broadcast %cst_102 : f32 to vector<16x16xf32>
      %188 = arith.select %109, %186, %187 : vector<16x16xi1>, vector<16x16xf32>
      %cst_103 = arith.constant dense<0xFF800000> : vector<16xf32>
      %189 = vector.multi_reduction <maximumf>, %188, %cst_103 [1] : vector<16x16xf32> to vector<16xf32>
      %190 = vector.shape_cast %189 : vector<16xf32> to vector<16x1xf32>
      %191 = vector.broadcast %190 : vector<16x1xf32> to vector<16x16xf32>
      %192 = arith.subf %188, %191 : vector<16x16xf32>
      %193 = math.exp %192 : vector<16x16xf32>
      %cst_104 = arith.constant dense<0.000000e+00> : vector<16xf32>
      %194 = vector.multi_reduction <add>, %193, %cst_104 [1] : vector<16x16xf32> to vector<16xf32>
      %195 = vector.shape_cast %194 : vector<16xf32> to vector<16x1xf32>
      %196 = tpu.reciprocal %195 {approx = true} : vector<16x1xf32> -> vector<16x1xf32>
      %197 = vector.broadcast %196 : vector<16x1xf32> to vector<16x16xf32>
      %198 = arith.mulf %193, %197 : vector<16x16xf32>
      %199 = arith.truncf %198 : vector<16x16xf32> to vector<16x16xbf16>
      %cst_105 = arith.constant dense<0.000000e+00> : vector<16x16xf32>
      %200 = tpu.matmul %199, %185, %cst_105 {dimension_numbers = #tpu.dot_dimension_numbers<[1], [0], [0], [1], [0, 0, 1, 1], [], []>} : vector<16x16xbf16>, vector<16x16xbf16>, vector<16x16xf32> -> vector<16x16xf32>
      %201 = arith.truncf %200 : vector<16x16xf32> to vector<16x16xbf16>
      %c0_106 = arith.constant 0 : index
      %202 = arith.index_cast %arg19 : i32 to index
      %c0_107 = arith.constant 0 : index
      %c0_108 = arith.constant 0 : index
      %203 = vector.load %arg7[%c0_106, %202, %c0_107, %c0_108] : memref<1x4x16x64xbf16, #tpu.memory_space<vmem>>, vector<1x1x16x64xbf16>
      %204 = vector.shape_cast %203 : vector<1x1x16x64xbf16> to vector<16x64xbf16>
      %cst_109 = arith.constant dense<0.000000e+00> : vector<16x64xf32>
      %205 = tpu.matmul %201, %204, %cst_109 {dimension_numbers = #tpu.dot_dimension_numbers<[1], [0], [0], [1], [0, 0, 1, 1], [], []>} : vector<16x16xbf16>, vector<16x64xbf16>, vector<16x64xf32> -> vector<16x64xf32>
      %206 = arith.addf %arg20, %205 : vector<16x64xf32>
      scf.yield %206 : vector<16x64xf32>
    }
    %c4_i32_59 = arith.constant 4 : i32
    %113 = arith.addf %4, %112 : vector<16x64xf32>
    %c0_60 = arith.constant 0 : index
    %c0_61 = arith.constant 0 : index
    %c0_62 = arith.constant 0 : index
    %114 = vector.load %arg8[%c0_60, %c0_61, %c0_62] : memref<1x1x64xf32, #tpu.memory_space<vmem>>, vector<1x1x64xf32>
    %115 = vector.shape_cast %114 : vector<1x1x64xf32> to vector<1x64xf32>
    %116 = vector.broadcast %115 : vector<1x64xf32> to vector<16x64xf32>
    %117 = arith.addf %113, %116 : vector<16x64xf32>
    %c0_63 = arith.constant 0 : index
    %c0_64 = arith.constant 0 : index
    %c0_65 = arith.constant 0 : index
    %118 = vector.load %arg9[%c0_63, %c0_64, %c0_65] : memref<1x1x64xf32, #tpu.memory_space<vmem>>, vector<1x1x64xf32>
    %119 = vector.shape_cast %118 : vector<1x1x64xf32> to vector<1x64xf32>
    %c0_66 = arith.constant 0 : index
    %c0_67 = arith.constant 0 : index
    %c0_68 = arith.constant 0 : index
    %120 = vector.load %arg10[%c0_66, %c0_67, %c0_68] : memref<1x1x64xf32, #tpu.memory_space<vmem>>, vector<1x1x64xf32>
    %121 = vector.shape_cast %120 : vector<1x1x64xf32> to vector<1x64xf32>
    %cst_69 = arith.constant dense<0.000000e+00> : vector<16xf32>
    %122 = vector.multi_reduction <add>, %117, %cst_69 [1] : vector<16x64xf32> to vector<16xf32>
    %123 = vector.shape_cast %122 : vector<16xf32> to vector<16x1xf32>
    %cst_70 = arith.constant 6.400000e+01 : f32
    %124 = vector.broadcast %cst_70 : f32 to vector<16x1xf32>
    %125 = arith.divf %123, %124 : vector<16x1xf32>
    %126 = vector.broadcast %125 : vector<16x1xf32> to vector<16x64xf32>
    %127 = arith.subf %117, %126 : vector<16x64xf32>
    %128 = arith.mulf %127, %127 : vector<16x64xf32>
    %cst_71 = arith.constant dense<0.000000e+00> : vector<16xf32>
    %129 = vector.multi_reduction <add>, %128, %cst_71 [1] : vector<16x64xf32> to vector<16xf32>
    %130 = vector.shape_cast %129 : vector<16xf32> to vector<16x1xf32>
    %cst_72 = arith.constant 6.400000e+01 : f32
    %131 = vector.broadcast %cst_72 : f32 to vector<16x1xf32>
    %132 = arith.divf %130, %131 : vector<16x1xf32>
    %133 = vector.broadcast %125 : vector<16x1xf32> to vector<16x64xf32>
    %134 = arith.subf %117, %133 : vector<16x64xf32>
    %cst_73 = arith.constant 9.99999974E-6 : f32
    %135 = vector.broadcast %cst_73 : f32 to vector<16x1xf32>
    %136 = arith.addf %132, %135 : vector<16x1xf32>
    %137 = math.rsqrt %136 : vector<16x1xf32>
    %138 = vector.broadcast %137 : vector<16x1xf32> to vector<16x64xf32>
    %139 = arith.mulf %134, %138 : vector<16x64xf32>
    %140 = vector.broadcast %119 : vector<1x64xf32> to vector<16x64xf32>
    %141 = arith.mulf %139, %140 : vector<16x64xf32>
    %142 = vector.broadcast %121 : vector<1x64xf32> to vector<16x64xf32>
    %143 = arith.addf %141, %142 : vector<16x64xf32>
    %144 = arith.truncf %143 : vector<16x64xf32> to vector<16x64xbf16>
    %c0_74 = arith.constant 0 : index
    %c0_75 = arith.constant 0 : index
    %c0_76 = arith.constant 0 : index
    %145 = vector.load %arg11[%c0_74, %c0_75, %c0_76] : memref<1x64x256xbf16, #tpu.memory_space<vmem>>, vector<1x64x256xbf16>
    %146 = vector.shape_cast %145 : vector<1x64x256xbf16> to vector<64x256xbf16>
    %cst_77 = arith.constant dense<0.000000e+00> : vector<16x256xf32>
    %147 = tpu.matmul %144, %146, %cst_77 {dimension_numbers = #tpu.dot_dimension_numbers<[1], [0], [0], [1], [0, 0, 1, 1], [], []>} : vector<16x64xbf16>, vector<64x256xbf16>, vector<16x256xf32> -> vector<16x256xf32>
    %c0_78 = arith.constant 0 : index
    %c0_79 = arith.constant 0 : index
    %c0_80 = arith.constant 0 : index
    %148 = vector.load %arg12[%c0_78, %c0_79, %c0_80] : memref<1x1x256xf32, #tpu.memory_space<vmem>>, vector<1x1x256xf32>
    %149 = vector.shape_cast %148 : vector<1x1x256xf32> to vector<1x256xf32>
    %150 = vector.broadcast %149 : vector<1x256xf32> to vector<16x256xf32>
    %151 = arith.addf %147, %150 : vector<16x256xf32>
    %cst_81 = arith.constant 5.000000e-01 : f32
    %152 = vector.broadcast %cst_81 : f32 to vector<16x256xf32>
    %153 = arith.mulf %152, %151 : vector<16x256xf32>
    %cst_82 = arith.constant 4.471500e-02 : f32
    %154 = vector.broadcast %cst_82 : f32 to vector<16x256xf32>
    %155 = arith.mulf %154, %151 : vector<16x256xf32>
    %156 = arith.mulf %155, %151 : vector<16x256xf32>
    %157 = arith.mulf %156, %151 : vector<16x256xf32>
    %158 = arith.addf %151, %157 : vector<16x256xf32>
    %cst_83 = arith.constant 0.797884583 : f32
    %159 = vector.broadcast %cst_83 : f32 to vector<16x256xf32>
    %160 = arith.mulf %159, %158 : vector<16x256xf32>
    %161 = math.tanh %160 : vector<16x256xf32>
    %cst_84 = arith.constant 1.000000e+00 : f32
    %162 = vector.broadcast %cst_84 : f32 to vector<16x256xf32>
    %163 = arith.addf %162, %161 : vector<16x256xf32>
    %164 = arith.mulf %153, %163 : vector<16x256xf32>
    %165 = arith.truncf %164 : vector<16x256xf32> to vector<16x256xbf16>
    %c0_85 = arith.constant 0 : index
    %c0_86 = arith.constant 0 : index
    %c0_87 = arith.constant 0 : index
    %166 = vector.load %arg13[%c0_85, %c0_86, %c0_87] : memref<1x256x64xbf16, #tpu.memory_space<vmem>>, vector<1x256x64xbf16>
    %167 = vector.shape_cast %166 : vector<1x256x64xbf16> to vector<256x64xbf16>
    %cst_88 = arith.constant dense<0.000000e+00> : vector<16x64xf32>
    %168 = tpu.matmul %165, %167, %cst_88 {dimension_numbers = #tpu.dot_dimension_numbers<[1], [0], [0], [1], [0, 0, 1, 1], [], []>} : vector<16x256xbf16>, vector<256x64xbf16>, vector<16x64xf32> -> vector<16x64xf32>
    %c0_89 = arith.constant 0 : index
    %c0_90 = arith.constant 0 : index
    %c0_91 = arith.constant 0 : index
    %169 = vector.load %arg14[%c0_89, %c0_90, %c0_91] : memref<1x1x64xf32, #tpu.memory_space<vmem>>, vector<1x1x64xf32>
    %170 = vector.shape_cast %169 : vector<1x1x64xf32> to vector<1x64xf32>
    %171 = vector.broadcast %170 : vector<1x64xf32> to vector<16x64xf32>
    %172 = arith.addf %168, %171 : vector<16x64xf32>
    %173 = arith.addf %117, %172 : vector<16x64xf32>
    %c0_92 = arith.constant 0 : index
    %c0_93 = arith.constant 0 : index
    %c0_94 = arith.constant 0 : index
    %174 = vector.load %arg15[%c0_92, %c0_93, %c0_94] : memref<1x16x64xf32, #tpu.memory_space<vmem>>, vector<1x16x64xf32>
    %175 = vector.shape_cast %174 : vector<1x16x64xf32> to vector<16x64xf32>
    %176 = vector.shape_cast %173 : vector<16x64xf32> to vector<1x16x64xf32>
    tpu.vector_store %arg15[%c0_92, %c0_93, %c0_94], %176 {strides = array<i32>} : memref<1x16x64xf32, #tpu.memory_space<vmem>>, vector<1x16x64xf32>,
    return
  }
  func.func @transform_0(%arg0: i32, %arg1: i32) -> (i32, i32, i32) {
    %c0_i32 = arith.constant 0 : i32
    %c0_i32_0 = arith.constant 0 : i32
    %c0_i32_1 = arith.constant 0 : i32
    return %arg0, %c0_i32, %c0_i32_0 : i32, i32, i32
  }
  func.func @transform_1(%arg0: i32, %arg1: i32) -> (i32, i32, i32) {
    %c0_i32 = arith.constant 0 : i32
    %c0_i32_0 = arith.constant 0 : i32
    %c0_i32_1 = arith.constant 0 : i32
    return %arg1, %c0_i32, %c0_i32_0 : i32, i32, i32
  }
  func.func @transform_2(%arg0: i32, %arg1: i32) -> (i32, i32, i32) {
    %c0_i32 = arith.constant 0 : i32
    %c0_i32_0 = arith.constant 0 : i32
    %c0_i32_1 = arith.constant 0 : i32
    return %arg1, %c0_i32, %c0_i32_0 : i32, i32, i32
  }
  func.func @transform_3(%arg0: i32, %arg1: i32) -> (i32, i32, i32) {
    %c0_i32 = arith.constant 0 : i32
    %c0_i32_0 = arith.constant 0 : i32
    %c0_i32_1 = arith.constant 0 : i32
    return %arg1, %c0_i32, %c0_i32_0 : i32, i32, i32
  }
  func.func @transform_4(%arg0: i32, %arg1: i32) -> (i32, i32, i32) {
    %c0_i32 = arith.constant 0 : i32
    %c0_i32_0 = arith.constant 0 : i32
    %c0_i32_1 = arith.constant 0 : i32
    return %arg1, %c0_i32, %c0_i32_0 : i32, i32, i32
  }
  func.func @transform_5(%arg0: i32, %arg1: i32) -> (i32, i32, i32, i32) {
    %c0_i32 = arith.constant 0 : i32
    %c0_i32_0 = arith.constant 0 : i32
    %c0_i32_1 = arith.constant 0 : i32
    %c0_i32_2 = arith.constant 0 : i32
    return %arg1, %c0_i32, %c0_i32_0, %c0_i32_1 : i32, i32, i32, i32
  }
  func.func @transform_6(%arg0: i32, %arg1: i32) -> (i32, i32, i32) {
    %c0_i32 = arith.constant 0 : i32
    %c0_i32_0 = arith.constant 0 : i32
    %c0_i32_1 = arith.constant 0 : i32
    return %arg1, %c0_i32, %c0_i32_0 : i32, i32, i32
  }
  func.func @transform_7(%arg0: i32, %arg1: i32) -> (i32, i32, i32) {
    %c0_i32 = arith.constant 0 : i32
    %c0_i32_0 = arith.constant 0 : i32
    %c0_i32_1 = arith.constant 0 : i32
    return %arg1, %c0_i32, %c0_i32_0 : i32, i32, i32
  }
  func.func @transform_8(%arg0: i32, %arg1: i32) -> (i32, i32, i32) {
    %c0_i32 = arith.constant 0 : i32
    %c0_i32_0 = arith.constant 0 : i32
    %c0_i32_1 = arith.constant 0 : i32
    return %arg1, %c0_i32, %c0_i32_0 : i32, i32, i32
  }
  func.func @transform_9(%arg0: i32, %arg1: i32) -> (i32, i32, i32) {
    %c0_i32 = arith.constant 0 : i32
    %c0_i32_0 = arith.constant 0 : i32
    %c0_i32_1 = arith.constant 0 : i32
    return %arg1, %c0_i32, %c0_i32_0 : i32, i32, i32
  }
  func.func @transform_10(%arg0: i32, %arg1: i32) -> (i32, i32, i32) {
    %c0_i32 = arith.constant 0 : i32
    %c0_i32_0 = arith.constant 0 : i32
    %c0_i32_1 = arith.constant 0 : i32
    return %arg1, %c0_i32, %c0_i32_0 : i32, i32, i32
  }
  func.func @transform_11(%arg0: i32, %arg1: i32) -> (i32, i32, i32) {
    %c0_i32 = arith.constant 0 : i32
    %c0_i32_0 = arith.constant 0 : i32
    %c0_i32_1 = arith.constant 0 : i32
    return %arg1, %c0_i32, %c0_i32_0 : i32, i32, i32
  }
  func.func @transform_12(%arg0: i32, %arg1: i32) -> (i32, i32, i32) {
    %c0_i32 = arith.constant 0 : i32
    %c0_i32_0 = arith.constant 0 : i32
    %c0_i32_1 = arith.constant 0 : i32
    return %arg1, %c0_i32, %c0_i32_0 : i32, i32, i32
  }
  func.func @transform_13(%arg0: i32, %arg1: i32) -> (i32, i32, i32) {
    %c0_i32 = arith.constant 0 : i32
    %c0_i32_0 = arith.constant 0 : i32
    %c0_i32_1 = arith.constant 0 : i32
    return %arg0, %c0_i32, %c0_i32_0 : i32, i32, i32
  }
}

</mosaic_0001>

<llo_original>
// kernel: tpu_custom_call.1
$region0: #{tpu_custom_call.1}
  #allocation0 [shape = 'u32[]', space=smem, size = 0x4, offset = 0x4, fixed_abs, tag = 'smem constant byte address 0x4 - core index']
  #allocation1 [shape = 'u32[144,128]{1,0:T(1,128)}', space=vmem, size = 0x12000, scoped, tag = 'internal scratch']
  #allocation2 [shape = 'bf16[4,16,16]{2,1,0:T(16,128)(2,1)}', space=vmem, size = 0x4000, scoped, tag = 'scratch operand']
  #allocation3 [shape = 'bf16[4,16,16]{2,1,0:T(16,128)(2,1)}', space=vmem, size = 0x4000, scoped, tag = 'scratch operand']
  #allocation4 [shape = 'bf16[4,16,16]{2,1,0:T(16,128)(2,1)}', space=vmem, size = 0x4000, scoped, tag = 'scratch operand']
  %s0 = inlined_call_operand.hbm [shape: f32[2,16,64], index: 0, kind: input, shape index: {}]
  %s1 = inlined_call_operand.hbm [shape: f32[2,1,64], index: 1, kind: input, shape index: {}]
  %s2 = inlined_call_operand.hbm [shape: f32[2,1,64], index: 2, kind: input, shape index: {}]
  %s3 = inlined_call_operand.hbm [shape: bf16[2,64,192], index: 3, kind: input, shape index: {}]
  %s4 = inlined_call_operand.hbm [shape: f32[2,1,192], index: 4, kind: input, shape index: {}]
  %s5 = inlined_call_operand.hbm [shape: bf16[2,4,16,64], index: 5, kind: input, shape index: {}]
  %s6 = inlined_call_operand.hbm [shape: f32[2,1,64], index: 6, kind: input, shape index: {}]
  %s7 = inlined_call_operand.hbm [shape: f32[2,1,64], index: 7, kind: input, shape index: {}]
  %s8 = inlined_call_operand.hbm [shape: f32[2,1,64], index: 8, kind: input, shape index: {}]
  %s9 = inlined_call_operand.hbm [shape: bf16[2,64,256], index: 9, kind: input, shape index: {}]
  %s10 = inlined_call_operand.hbm [shape: f32[2,1,256], index: 10, kind: input, shape index: {}]
  %s11 = inlined_call_operand.hbm [shape: bf16[2,256,64], index: 11, kind: input, shape index: {}]
  %s12 = inlined_call_operand.hbm [shape: f32[2,1,64], index: 12, kind: input, shape index: {}]
  %s13 = inlined_call_operand.hbm [shape: f32[2,16,64], index: 13, kind: output, shape index: {}]
  %s14 = sld [smem:[#allocation0]]
  $region148: #{tpu_custom_call.1} parent=0
    _
  %s16 = ssub.s32 1, %s14
  %s17 = scalar_select 0, %s16, %s14
  $region1: #{tpu_custom_call.1} parent=0
    #allocation5 [shape = 'u8[16384]{0}', space=vmem, size = 0x4000, scoped, tag = 'input window, operand 0']
    #allocation6 [shape = 's32[2]{0}', space=sflag, size = 0x8, scoped, tag = 'scoped memory for tpu_custom_call.1']
    #allocation7 [shape = 's32[2]{0}', space=sflag, size = 0x8, scoped, tag = 'scoped memory for tpu_custom_call.1']
    #allocation8 [shape = 'u8[1024]{0}', space=vmem, size = 0x400, scoped, tag = 'input window, operand 1']
    #allocation9 [shape = 's32[2]{0}', space=sflag, size = 0x8, scoped, tag = 'scoped memory for tpu_custom_call.1']
    #allocation10 [shape = 'u8[1024]{0}', space=vmem, size = 0x400, scoped, tag = 'input window, operand 2']
    #allocation11 [shape = 'u8[65536]{0}', space=vmem, size = 0x10000, scoped, tag = 'input window, operand 3']
    #allocation12 [shape = 's32[2]{0}', space=sflag, size = 0x8, scoped, tag = 'scoped memory for tpu_custom_call.1']
    #allocation13 [shape = 'u8[2048]{0}', space=vmem, size = 0x800, scoped, tag = 'input window, operand 4']
    #allocation14 [shape = 'u8[32768]{0}', space=vmem, size = 0x8000, scoped, tag = 'input window, operand 5']
    #allocation15 [shape = 's32[2]{0}', space=sflag, size = 0x8, scoped, tag = 'scoped memory for tpu_custom_call.1']
    #allocation16 [shape = 'u8[1024]{0}', space=vmem, size = 0x400, scoped, tag = 'input window, operand 6']
    #allocation17 [shape = 'u8[1024]{0}', space=vmem, size = 0x400, scoped, tag = 'input window, operand 7']
    #allocation18 [shape = 's32[2]{0}', space=sflag, size = 0x8, scoped, tag = 'scoped memory for tpu_custom_call.1']
    #allocation19 [shape = 'u8[1024]{0}', space=vmem, size = 0x400, scoped, tag = 'input window, operand 8']
    #allocation20 [shape = 'u8[65536]{0}', space=vmem, size = 0x10000, scoped, tag = 'input window, operand 9']
    #allocation21 [shape = 's32[2]{0}', space=sflag, size = 0x8, scoped, tag = 'scoped memory for tpu_custom_call.1']
    #allocation22 [shape = 'u8[2048]{0}', space=vmem, size = 0x800, scoped, tag = 'input window, operand 10']
    #allocation23 [shape = 'u8[131072]{0}', space=vmem, size = 0x20000, scoped, tag = 'input window, operand 11']
    #allocation24 [shape = 's32[2]{0}', space=sflag, size = 0x8, scoped, tag = 'scoped memory for tpu_custom_call.1']
    #allocation25 [shape = 'u8[1024]{0}', space=vmem, size = 0x400, scoped, tag = 'input window, operand 12']
    #allocation26 [shape = 'u8[16384]{0}', space=vmem, size = 0x4000, scoped, tag = 'output window, operand 0']
    %18 = vsyncpa [#allocation6], 0
    %s19 = scalar_lea.sflag [#allocation6], 1
    %20 = vsyncpa %s19, 0
    %21 = vsyncpa [#allocation9], 0
    %s22 = scalar_lea.sflag [#allocation9], 1
    %23 = vsyncpa %s22, 0
    %24 = vsyncpa [#allocation12], 0
    %s25 = scalar_lea.sflag [#allocation12], 1
    %26 = vsyncpa %s25, 0
    %27 = vsyncpa [#allocation15], 0
    %s28 = scalar_lea.sflag [#allocation15], 1
    %29 = vsyncpa %s28, 0
    %30 = vsyncpa [#allocation18], 0
    %s31 = scalar_lea.sflag [#allocation18], 1
    %32 = vsyncpa %s31, 0
    %33 = vsyncpa [#allocation21], 0
    %s34 = scalar_lea.sflag [#allocation21], 1
    %35 = vsyncpa %s34, 0
    %36 = vsyncpa [#allocation24], 0
    %s37 = scalar_lea.sflag [#allocation24], 1
    %38 = vsyncpa %s37, 0
    %39 = vsyncpa [#allocation7], 0
    %s40 = scalar_lea.sflag [#allocation7], 1
    %41 = vsyncpa %s40, 0
    loop: start=0, step=1, limit=6
    $region2: #{tpu_custom_call.1} parent=1 // loop_pre_header
      _
    $region3: #{tpu_custom_call.1} parent=1 // loop_header
      %s43 = sphi 0, %s47
      %p44 = scmp.ge.s32.totalorder %s43, 6
      %s50 = sphi 0, %s62
      %s51 = sphi 0, %s58
      %s52 = sphi 0, %s50
      %s53 = sphi 0, %s51
      %s54 = sphi 0, %s52
      %s55 = sphi 0, %s53
      %s65 = sphi 0, %s67
      %s68 = sphi 0, %s65
      %s69 = sphi 0, %s68
      %s85 = sphi 0, %s69
      %s91 = sphi 0, %s93
      %s94 = sphi 0, %s91
      %s95 = sphi 0, %s94
      %s111 = sphi 0, %s95
      %s117 = sphi 0, %s119
      %s120 = sphi 0, %s117
      %s121 = sphi 0, %s120
      %s137 = sphi 0, %s121
      %s143 = sphi 0, %s145
      %s146 = sphi 0, %s143
      %s147 = sphi 0, %s146
      %s163 = sphi 0, %s147
      %s169 = sphi 0, %s171
      %s172 = sphi 0, %s169
      %s173 = sphi 0, %s172
      %s189 = sphi 0, %s173
      %s195 = sphi 0, %s197
      %s198 = sphi 0, %s195
      %s199 = sphi 0, %s198
      %s215 = sphi 0, %s199
      %s221 = sphi 0, %s223
      %s224 = sphi 0, %s221
      %s225 = sphi 0, %s224
      %s241 = sphi 0, %s225
      %s247 = sphi 0, %s249
      %s250 = sphi 0, %s247
      %s251 = sphi 0, %s250
      %s267 = sphi 0, %s251
      %s273 = sphi 0, %s275
      %s276 = sphi 0, %s273
      %s277 = sphi 0, %s276
      %s293 = sphi 0, %s277
      %s299 = sphi 0, %s301
      %s302 = sphi 0, %s299
      %s303 = sphi 0, %s302
      %s319 = sphi 0, %s303
      %s325 = sphi 0, %s327
      %s328 = sphi 0, %s325
      %s329 = sphi 0, %s328
      %s345 = sphi 0, %s329
      %s351 = sphi 0, %s353
      %s354 = sphi 0, %s351
      %s355 = sphi 0, %s354
      %s371 = sphi 0, %s355
      %s377 = sphi 0, %s379
      %s380 = sphi 0, %s377
      %s381 = sphi 0, %s380
      %s397 = sphi 0, %s381
      %s403 = sphi 0, %s405
      %s406 = sphi 0, %s403
      %s407 = sphi 0, %s406
      %s423 = sphi 0, %s407
    $region4: #{tpu_custom_call.1} parent=1 // loop_header_branch
      %46 = sbr.rel (%p44) target = $region8
    $region5: #{tpu_custom_call.1} parent=1 // loop_body
      %s48 = ssub.s32 %s43, 1
      %s49 = ssub.s32 %s43, 2
      %s56 = sadd.s32 1, %s51
      %p57 = scmp.ge.s32.totalorder %s56, 2
      %s58 = scalar_select %p57, 0, %s56
      %s59 = sadd.s32 1, %s50
      %s60 = scalar_select %p57, %s59, %s50
      %p61 = scmp.ge.s32.totalorder %s60, 2
      %s62 = scalar_select %p61, 0, %s60
      %s63 = ssub.s32 %s50, %s62
      %p64 = scmp.eq.s32.totalorder %s63, 0
      %s66 = sadd.s32 %s65, 1
      %s67 = scalar_select %p64, %s65, %s66
      %p70 = pneg %p64
      %p71 = scmp.eq.s32.totalorder %s43, 3
      %p72 = por %p70, %p71
      %p73 = scmp.ne.s32.totalorder %s65, %s68
      %p74 = scmp.eq.s32.totalorder %s43, 0
      %p75 = por %p73, %p74
      %p76 = scmp.ne.s32.totalorder %s65, %s68
      %p77 = scmp.eq.s32.totalorder %s48, 3
      %p78 = por %p76, %p77
      %p79 = scmp.ne.s32.totalorder %s68, %s69
      %p80 = scmp.eq.s32.totalorder %s48, 0
      %p81 = por %p79, %p80
      %p82 = scmp.ne.s32.totalorder %s68, %s69
      %p83 = scmp.eq.s32.totalorder %s49, 3
      %p84 = por %p82, %p83
      %p86 = scmp.ne.s32.totalorder %s69, %s85
      %p87 = scmp.eq.s32.totalorder %s49, 0
      %p88 = por %p86, %p87
      %s89 = ssub.s32 %s51, %s58
      %p90 = scmp.eq.s32.totalorder %s89, 0
      %s92 = sadd.s32 %s91, 1
      %s93 = scalar_select %p90, %s91, %s92
      %p96 = pneg %p90
      %p97 = scmp.eq.s32.totalorder %s43, 3
      %p98 = por %p96, %p97
      %p99 = scmp.ne.s32.totalorder %s91, %s94
      %p100 = scmp.eq.s32.totalorder %s43, 0
      %p101 = por %p99, %p100
      %p102 = scmp.ne.s32.totalorder %s91, %s94
      %p103 = scmp.eq.s32.totalorder %s48, 3
      %p104 = por %p102, %p103
      %p105 = scmp.ne.s32.totalorder %s94, %s95
      %p106 = scmp.eq.s32.totalorder %s48, 0
      %p107 = por %p105, %p106
      %p108 = scmp.ne.s32.totalorder %s94, %s95
      %p109 = scmp.eq.s32.totalorder %s49, 3
      %p110 = por %p108, %p109
      %p112 = scmp.ne.s32.totalorder %s95, %s111
      %p113 = scmp.eq.s32.totalorder %s49, 0
      %p114 = por %p112, %p113
      %s115 = ssub.s32 %s51, %s58
      %p116 = scmp.eq.s32.totalorder %s115, 0
      %s118 = sadd.s32 %s117, 1
      %s119 = scalar_select %p116, %s117, %s118
      %p122 = pneg %p116
      %p123 = scmp.eq.s32.totalorder %s43, 3
      %p124 = por %p122, %p123
      %p125 = scmp.ne.s32.totalorder %s117, %s120
      %p126 = scmp.eq.s32.totalorder %s43, 0
      %p127 = por %p125, %p126
      %p128 = scmp.ne.s32.totalorder %s117, %s120
      %p129 = scmp.eq.s32.totalorder %s48, 3
      %p130 = por %p128, %p129
      %p131 = scmp.ne.s32.totalorder %s120, %s121
      %p132 = scmp.eq.s32.totalorder %s48, 0
      %p133 = por %p131, %p132
      %p134 = scmp.ne.s32.totalorder %s120, %s121
      %p135 = scmp.eq.s32.totalorder %s49, 3
      %p136 = por %p134, %p135
      %p138 = scmp.ne.s32.totalorder %s121, %s137
      %p139 = scmp.eq.s32.totalorder %s49, 0
      %p140 = por %p138, %p139
      %s141 = ssub.s32 %s51, %s58
      %p142 = scmp.eq.s32.totalorder %s141, 0
      %s144 = sadd.s32 %s143, 1
      %s145 = scalar_select %p142, %s143, %s144
      %p148 = pneg %p142
      %p149 = scmp.eq.s32.totalorder %s43, 3
      %p150 = por %p148, %p149
      %p151 = scmp.ne.s32.totalorder %s143, %s146
      %p152 = scmp.eq.s32.totalorder %s43, 0
      %p153 = por %p151, %p152
      %p154 = scmp.ne.s32.totalorder %s143, %s146
      %p155 = scmp.eq.s32.totalorder %s48, 3
      %p156 = por %p154, %p155
      %p157 = scmp.ne.s32.totalorder %s146, %s147
      %p158 = scmp.eq.s32.totalorder %s48, 0
      %p159 = por %p157, %p158
      %p160 = scmp.ne.s32.totalorder %s146, %s147
      %p161 = scmp.eq.s32.totalorder %s49, 3
      %p162 = por %p160, %p161
      %p164 = scmp.ne.s32.totalorder %s147, %s163
      %p165 = scmp.eq.s32.totalorder %s49, 0
      %p166 = por %p164, %p165
      %s167 = ssub.s32 %s51, %s58
      %p168 = scmp.eq.s32.totalorder %s167, 0
      %s170 = sadd.s32 %s169, 1
      %s171 = scalar_select %p168, %s169, %s170
      %p174 = pneg %p168
      %p175 = scmp.eq.s32.totalorder %s43, 3
      %p176 = por %p174, %p175
      %p177 = scmp.ne.s32.totalorder %s169, %s172
      %p178 = scmp.eq.s32.totalorder %s43, 0
      %p179 = por %p177, %p178
      %p180 = scmp.ne.s32.totalorder %s169, %s172
      %p181 = scmp.eq.s32.totalorder %s48, 3
      %p182 = por %p180, %p181
      %p183 = scmp.ne.s32.totalorder %s172, %s173
      %p184 = scmp.eq.s32.totalorder %s48, 0
      %p185 = por %p183, %p184
      %p186 = scmp.ne.s32.totalorder %s172, %s173
      %p187 = scmp.eq.s32.totalorder %s49, 3
      %p188 = por %p186, %p187
      %p190 = scmp.ne.s32.totalorder %s173, %s189
      %p191 = scmp.eq.s32.totalorder %s49, 0
      %p192 = por %p190, %p191
      %s193 = ssub.s32 %s51, %s58
      %p194 = scmp.eq.s32.totalorder %s193, 0
      %s196 = sadd.s32 %s195, 1
      %s197 = scalar_select %p194, %s195, %s196
      %p200 = pneg %p194
      %p201 = scmp.eq.s32.totalorder %s43, 3
      %p202 = por %p200, %p201
      %p203 = scmp.ne.s32.totalorder %s195, %s198
      %p204 = scmp.eq.s32.totalorder %s43, 0
      %p205 = por %p203, %p204
      %p206 = scmp.ne.s32.totalorder %s195, %s198
      %p207 = scmp.eq.s32.totalorder %s48, 3
      %p208 = por %p206, %p207
      %p209 = scmp.ne.s32.totalorder %s198, %s199
      %p210 = scmp.eq.s32.totalorder %s48, 0
      %p211 = por %p209, %p210
      %p212 = scmp.ne.s32.totalorder %s198, %s199
      %p213 = scmp.eq.s32.totalorder %s49, 3
      %p214 = por %p212, %p213
      %p216 = scmp.ne.s32.totalorder %s199, %s215
      %p217 = scmp.eq.s32.totalorder %s49, 0
      %p218 = por %p216, %p217
      %s219 = ssub.s32 %s51, %s58
      %p220 = scmp.eq.s32.totalorder %s219, 0
      %s222 = sadd.s32 %s221, 1
      %s223 = scalar_select %p220, %s221, %s222
      %p226 = pneg %p220
      %p227 = scmp.eq.s32.totalorder %s43, 3
      %p228 = por %p226, %p227
      %p229 = scmp.ne.s32.totalorder %s221, %s224
      %p230 = scmp.eq.s32.totalorder %s43, 0
      %p231 = por %p229, %p230
      %p232 = scmp.ne.s32.totalorder %s221, %s224
      %p233 = scmp.eq.s32.totalorder %s48, 3
      %p234 = por %p232, %p233
      %p235 = scmp.ne.s32.totalorder %s224, %s225
      %p236 = scmp.eq.s32.totalorder %s48, 0
      %p237 = por %p235, %p236
      %p238 = scmp.ne.s32.totalorder %s224, %s225
      %p239 = scmp.eq.s32.totalorder %s49, 3
      %p240 = por %p238, %p239
      %p242 = scmp.ne.s32.totalorder %s225, %s241
      %p243 = scmp.eq.s32.totalorder %s49, 0
      %p244 = por %p242, %p243
      %s245 = ssub.s32 %s51, %s58
      %p246 = scmp.eq.s32.totalorder %s245, 0
      %s248 = sadd.s32 %s247, 1
      %s249 = scalar_select %p246, %s247, %s248
      %p252 = pneg %p246
      %p253 = scmp.eq.s32.totalorder %s43, 3
      %p254 = por %p252, %p253
      %p255 = scmp.ne.s32.totalorder %s247, %s250
      %p256 = scmp.eq.s32.totalorder %s43, 0
      %p257 = por %p255, %p256
      %p258 = scmp.ne.s32.totalorder %s247, %s250
      %p259 = scmp.eq.s32.totalorder %s48, 3
      %p260 = por %p258, %p259
      %p261 = scmp.ne.s32.totalorder %s250, %s251
      %p262 = scmp.eq.s32.totalorder %s48, 0
      %p263 = por %p261, %p262
      %p264 = scmp.ne.s32.totalorder %s250, %s251
      %p265 = scmp.eq.s32.totalorder %s49, 3
      %p266 = por %p264, %p265
      %p268 = scmp.ne.s32.totalorder %s251, %s267
      %p269 = scmp.eq.s32.totalorder %s49, 0
      %p270 = por %p268, %p269
      %s271 = ssub.s32 %s51, %s58
      %p272 = scmp.eq.s32.totalorder %s271, 0
      %s274 = sadd.s32 %s273, 1
      %s275 = scalar_select %p272, %s273, %s274
      %p278 = pneg %p272
      %p279 = scmp.eq.s32.totalorder %s43, 3
      %p280 = por %p278, %p279
      %p281 = scmp.ne.s32.totalorder %s273, %s276
      %p282 = scmp.eq.s32.totalorder %s43, 0
      %p283 = por %p281, %p282
      %p284 = scmp.ne.s32.totalorder %s273, %s276
      %p285 = scmp.eq.s32.totalorder %s48, 3
      %p286 = por %p284, %p285
      %p287 = scmp.ne.s32.totalorder %s276, %s277
      %p288 = scmp.eq.s32.totalorder %s48, 0
      %p289 = por %p287, %p288
      %p290 = scmp.ne.s32.totalorder %s276, %s277
      %p291 = scmp.eq.s32.totalorder %s49, 3
      %p292 = por %p290, %p291
      %p294 = scmp.ne.s32.totalorder %s277, %s293
      %p295 = scmp.eq.s32.totalorder %s49, 0
      %p296 = por %p294, %p295
      %s297 = ssub.s32 %s51, %s58
      %p298 = scmp.eq.s32.totalorder %s297, 0
      %s300 = sadd.s32 %s299, 1
      %s301 = scalar_select %p298, %s299, %s300
      %p304 = pneg %p298
      %p305 = scmp.eq.s32.totalorder %s43, 3
      %p306 = por %p304, %p305
      %p307 = scmp.ne.s32.totalorder %s299, %s302
      %p308 = scmp.eq.s32.totalorder %s43, 0
      %p309 = por %p307, %p308
      %p310 = scmp.ne.s32.totalorder %s299, %s302
      %p311 = scmp.eq.s32.totalorder %s48, 3
      %p312 = por %p310, %p311
      %p313 = scmp.ne.s32.totalorder %s302, %s303
      %p314 = scmp.eq.s32.totalorder %s48, 0
      %p315 = por %p313, %p314
      %p316 = scmp.ne.s32.totalorder %s302, %s303
      %p317 = scmp.eq.s32.totalorder %s49, 3
      %p318 = por %p316, %p317
      %p320 = scmp.ne.s32.totalorder %s303, %s319
      %p321 = scmp.eq.s32.totalorder %s49, 0
      %p322 = por %p320, %p321
      %s323 = ssub.s32 %s51, %s58
      %p324 = scmp.eq.s32.totalorder %s323, 0
      %s326 = sadd.s32 %s325, 1
      %s327 = scalar_select %p324, %s325, %s326
      %p330 = pneg %p324
      %p331 = scmp.eq.s32.totalorder %s43, 3
      %p332 = por %p330, %p331
      %p333 = scmp.ne.s32.totalorder %s325, %s328
      %p334 = scmp.eq.s32.totalorder %s43, 0
      %p335 = por %p333, %p334
      %p336 = scmp.ne.s32.totalorder %s325, %s328
      %p337 = scmp.eq.s32.totalorder %s48, 3
      %p338 = por %p336, %p337
      %p339 = scmp.ne.s32.totalorder %s328, %s329
      %p340 = scmp.eq.s32.totalorder %s48, 0
      %p341 = por %p339, %p340
      %p342 = scmp.ne.s32.totalorder %s328, %s329
      %p343 = scmp.eq.s32.totalorder %s49, 3
      %p344 = por %p342, %p343
      %p346 = scmp.ne.s32.totalorder %s329, %s345
      %p347 = scmp.eq.s32.totalorder %s49, 0
      %p348 = por %p346, %p347
      %s349 = ssub.s32 %s51, %s58
      %p350 = scmp.eq.s32.totalorder %s349, 0
      %s352 = sadd.s32 %s351, 1
      %s353 = scalar_select %p350, %s351, %s352
      %p356 = pneg %p350
      %p357 = scmp.eq.s32.totalorder %s43, 3
      %p358 = por %p356, %p357
      %p359 = scmp.ne.s32.totalorder %s351, %s354
      %p360 = scmp.eq.s32.totalorder %s43, 0
      %p361 = por %p359, %p360
      %p362 = scmp.ne.s32.totalorder %s351, %s354
      %p363 = scmp.eq.s32.totalorder %s48, 3
      %p364 = por %p362, %p363
      %p365 = scmp.ne.s32.totalorder %s354, %s355
      %p366 = scmp.eq.s32.totalorder %s48, 0
      %p367 = por %p365, %p366
      %p368 = scmp.ne.s32.totalorder %s354, %s355
      %p369 = scmp.eq.s32.totalorder %s49, 3
      %p370 = por %p368, %p369
      %p372 = scmp.ne.s32.totalorder %s355, %s371
      %p373 = scmp.eq.s32.totalorder %s49, 0
      %p374 = por %p372, %p373
      %s375 = ssub.s32 %s51, %s58
      %p376 = scmp.eq.s32.totalorder %s375, 0
      %s378 = sadd.s32 %s377, 1
      %s379 = scalar_select %p376, %s377, %s378
      %p382 = pneg %p376
      %p383 = scmp.eq.s32.totalorder %s43, 3
      %p384 = por %p382, %p383
      %p385 = scmp.ne.s32.totalorder %s377, %s380
      %p386 = scmp.eq.s32.totalorder %s43, 0
      %p387 = por %p385, %p386
      %p388 = scmp.ne.s32.totalorder %s377, %s380
      %p389 = scmp.eq.s32.totalorder %s48, 3
      %p390 = por %p388, %p389
      %p391 = scmp.ne.s32.totalorder %s380, %s381
      %p392 = scmp.eq.s32.totalorder %s48, 0
      %p393 = por %p391, %p392
      %p394 = scmp.ne.s32.totalorder %s380, %s381
      %p395 = scmp.eq.s32.totalorder %s49, 3
      %p396 = por %p394, %p395
      %p398 = scmp.ne.s32.totalorder %s381, %s397
      %p399 = scmp.eq.s32.totalorder %s49, 0
      %p400 = por %p398, %p399
      %s401 = ssub.s32 %s50, %s62
      %p402 = scmp.eq.s32.totalorder %s401, 0
      %s404 = sadd.s32 %s403, 1
      %s405 = scalar_select %p402, %s403, %s404
      %p408 = pneg %p402
      %p409 = scmp.eq.s32.totalorder %s43, 3
      %p410 = por %p408, %p409
      %p411 = scmp.ne.s32.totalorder %s403, %s406
      %p412 = scmp.eq.s32.totalorder %s43, 0
      %p413 = por %p411, %p412
      %p414 = scmp.ne.s32.totalorder %s403, %s406
      %p415 = scmp.eq.s32.totalorder %s48, 3
      %p416 = por %p414, %p415
      %p417 = scmp.ne.s32.totalorder %s406, %s407
      %p418 = scmp.eq.s32.totalorder %s48, 0
      %p419 = por %p417, %p418
      %p420 = scmp.ne.s32.totalorder %s406, %s407
      %p421 = scmp.eq.s32.totalorder %s49, 3
      %p422 = por %p420, %p421
      %p424 = scmp.ne.s32.totalorder %s407, %s423
      %p425 = scmp.eq.s32.totalorder %s49, 0
      %p426 = por %p424, %p425
      %p427 = scmp.le.s32.totalorder 1, %s43
      %p428 = scmp.lt.s32.totalorder %s43, 5
      %p429 = pnand %p427, %p428
      %p430 = pneg %p429
      // Predicated region
      $region9: #{tpu_custom_call.1} parent=5 // pred_check
        _
      $region10: #{tpu_custom_call.1} parent=5 // pred_check_branch
        %432 = sbr.rel (%p429) target = $region12
      $region11: #{tpu_custom_call.1} parent=5 // pred_region
        %s433 = ssub.s32 %s43, 1
      $region12: #{tpu_custom_call.1} parent=5 // pred_fallthru
        _
      %p434 = scmp.lt.s32.totalorder %s43, 4
      // Predicated region
      $region13: #{tpu_custom_call.1} parent=5 // pred_check
        %p435 = pneg %p434
      $region14: #{tpu_custom_call.1} parent=5 // pred_check_branch
        %437 = sbr.rel (%p435) target = $region16
      $region15: #{tpu_custom_call.1} parent=5 // pred_region
        // Predicated region
        $region17: #{tpu_custom_call.1} parent=15 // pred_check
          %p438 = pneg %p75
        $region18: #{tpu_custom_call.1} parent=15 // pred_check_branch
          %440 = sbr.rel (%p438) target = $region20
        $region19: #{tpu_custom_call.1} parent=15 // pred_region
          %s441 = sand.u32 %s65, 1
          %s442 = scalar_lea.sflag [#allocation6], %s441
          %s443 = sand.u32 %s65, 1
          %s444 = smul.addr %s443, 16
          %s445 = scalar_lea.vmem [#allocation5], %s444
          %s447 = ssub.s32 256, 256
          %448 = vsyncadd %s442, %s447
          %s449 = smul.addr %s50, 2
          %s450 = smul.addr %s449, 128
          %s451 = scalar_lea.hbm %s0, %s450
          %s452 = sshll.u32 %s445, 4
          %s453 = int_to_ptr.vmem [resolvable:$true] %s452
          %458 = dma.hbm_to_vmem [thread:$0]  %s451, 256, %s453, %s442, 128, 128, 8
        $region20: #{tpu_custom_call.1} parent=15 // pred_fallthru
          _
        // Predicated region
        $region21: #{tpu_custom_call.1} parent=15 // pred_check
          %p459 = pneg %p101
        $region22: #{tpu_custom_call.1} parent=15 // pred_check_branch
          %461 = sbr.rel (%p459) target = $region24
        $region23: #{tpu_custom_call.1} parent=15 // pred_region
          %s462 = sand.u32 %s43, 1
          %s463 = scalar_lea.sflag [#allocation9], %s462
          %s464 = sand.u32 %s91, 1
          %s465 = scalar_lea.vmem [#allocation8], %s464
          %s467 = ssub.s32 16, 16
          %468 = vsyncadd %s463, %s467
          %s469 = smul.addr %s51, 16
          %s470 = scalar_lea.hbm %s1, %s469
          %s472 = sshll.u32 %s465, 4
          %s473 = int_to_ptr.vmem [resolvable:$true] %s472
          %475 = dma.hbm_to_vmem [thread:$0]  %s470, 16, %s473, %s463
        $region24: #{tpu_custom_call.1} parent=15 // pred_fallthru
          _
        // Predicated region
        $region25: #{tpu_custom_call.1} parent=15 // pred_check
          %p476 = pneg %p127
        $region26: #{tpu_custom_call.1} parent=15 // pred_check_branch
          %478 = sbr.rel (%p476) target = $region28
        $region27: #{tpu_custom_call.1} parent=15 // pred_region
          %s479 = sand.u32 %s43, 1
          %s480 = scalar_lea.sflag [#allocation9], %s479
          %s481 = sand.u32 %s117, 1
          %s482 = scalar_lea.vmem [#allocation10], %s481
          %s484 = ssub.s32 16, 16
          %485 = vsyncadd %s480, %s484
          %s486 = smul.addr %s51, 16
          %s487 = scalar_lea.hbm %s2, %s486
          %s489 = sshll.u32 %s482, 4
          %s490 = int_to_ptr.vmem [resolvable:$true] %s489
          %492 = dma.hbm_to_vmem [thread:$0]  %s487, 16, %s490, %s480
        $region28: #{tpu_custom_call.1} parent=15 // pred_fallthru
          _
        // Predicated region
        $region29: #{tpu_custom_call.1} parent=15 // pred_check
          %p493 = pneg %p153
        $region30: #{tpu_custom_call.1} parent=15 // pred_check_branch
          %495 = sbr.rel (%p493) target = $region32
        $region31: #{tpu_custom_call.1} parent=15 // pred_region
          %s496 = sand.u32 %s43, 1
          %s497 = scalar_lea.sflag [#allocation12], %s496
          %s498 = sand.u32 %s143, 1
          %s499 = smul.addr %s498, 64
          %s500 = scalar_lea.vmem [#allocation11], %s499
          %s502 = ssub.s32 1024, 1024
          %503 = vsyncadd %s497, %s502
          %s504 = smul.addr %s51, 16
          %s505 = smul.addr %s504, 64
          %s506 = scalar_lea.hbm %s3, %s505
          %s507 = sshll.u32 %s500, 4
          %s508 = int_to_ptr.vmem [resolvable:$true] %s507
          %513 = dma.hbm_to_vmem [thread:$0]  %s506, 1024, %s508, %s497, 128, 128, 8
        $region32: #{tpu_custom_call.1} parent=15 // pred_fallthru
          _
        // Predicated region
        $region33: #{tpu_custom_call.1} parent=15 // pred_check
          %p514 = pneg %p179
        $region34: #{tpu_custom_call.1} parent=15 // pred_check_branch
          %516 = sbr.rel (%p514) target = $region36
        $region35: #{tpu_custom_call.1} parent=15 // pred_region
          %s517 = sand.u32 %s43, 1
          %s518 = scalar_lea.sflag [#allocation12], %s517
          %s519 = sand.u32 %s169, 1
          %s520 = smul.addr %s519, 2
          %s521 = scalar_lea.vmem [#allocation13], %s520
          %s523 = ssub.s32 32, 32
          %524 = vsyncadd %s518, %s523
          %s525 = smul.addr %s51, 2
          %s526 = smul.addr %s525, 16
          %s527 = scalar_lea.hbm %s4, %s526
          %s529 = sshll.u32 %s521, 4
          %s530 = int_to_ptr.vmem [resolvable:$true] %s529
          %532 = dma.hbm_to_vmem [thread:$0]  %s527, 32, %s530, %s518
        $region36: #{tpu_custom_call.1} parent=15 // pred_fallthru
          _
        // Predicated region
        $region37: #{tpu_custom_call.1} parent=15 // pred_check
          %p533 = pneg %p205
        $region38: #{tpu_custom_call.1} parent=15 // pred_check_branch
          %535 = sbr.rel (%p533) target = $region40
        $region39: #{tpu_custom_call.1} parent=15 // pred_region
          %s536 = sand.u32 %s43, 1
          %s537 = scalar_lea.sflag [#allocation15], %s536
          %s538 = sand.u32 %s195, 1
          %s539 = smul.addr %s538, 32
          %s540 = scalar_lea.vmem [#allocation14], %s539
          %s542 = ssub.s32 512, 512
          %543 = vsyncadd %s537, %s542
          %s544 = smul.addr %s51, 8
          %s545 = smul.addr %s544, 64
          %s546 = scalar_lea.hbm %s5, %s545
          %s547 = sshll.u32 %s540, 4
          %s548 = int_to_ptr.vmem [resolvable:$true] %s547
          %553 = dma.hbm_to_vmem [thread:$0]  %s546, 512, %s548, %s537, 64, 64, 4
        $region40: #{tpu_custom_call.1} parent=15 // pred_fallthru
          _
        // Predicated region
        $region41: #{tpu_custom_call.1} parent=15 // pred_check
          %p554 = pneg %p231
        $region42: #{tpu_custom_call.1} parent=15 // pred_check_branch
          %556 = sbr.rel (%p554) target = $region44
        $region43: #{tpu_custom_call.1} parent=15 // pred_region
          %s557 = sand.u32 %s43, 1
          %s558 = scalar_lea.sflag [#allocation15], %s557
          %s559 = sand.u32 %s221, 1
          %s560 = scalar_lea.vmem [#allocation16], %s559
          %s562 = ssub.s32 16, 16
          %563 = vsyncadd %s558, %s562
          %s564 = smul.addr %s51, 16
          %s565 = scalar_lea.hbm %s6, %s564
          %s567 = sshll.u32 %s560, 4
          %s568 = int_to_ptr.vmem [resolvable:$true] %s567
          %570 = dma.hbm_to_vmem [thread:$0]  %s565, 16, %s568, %s558
        $region44: #{tpu_custom_call.1} parent=15 // pred_fallthru
          _
        // Predicated region
        $region45: #{tpu_custom_call.1} parent=15 // pred_check
          %p571 = pneg %p257
        $region46: #{tpu_custom_call.1} parent=15 // pred_check_branch
          %573 = sbr.rel (%p571) target = $region48
        $region47: #{tpu_custom_call.1} parent=15 // pred_region
          %s574 = sand.u32 %s43, 1
          %s575 = scalar_lea.sflag [#allocation18], %s574
          %s576 = sand.u32 %s247, 1
          %s577 = scalar_lea.vmem [#allocation17], %s576
          %s579 = ssub.s32 16, 16
          %580 = vsyncadd %s575, %s579
          %s581 = smul.addr %s51, 16
          %s582 = scalar_lea.hbm %s7, %s581
          %s584 = sshll.u32 %s577, 4
          %s585 = int_to_ptr.vmem [resolvable:$true] %s584
          %587 = dma.hbm_to_vmem [thread:$0]  %s582, 16, %s585, %s575
        $region48: #{tpu_custom_call.1} parent=15 // pred_fallthru
          _
        // Predicated region
        $region49: #{tpu_custom_call.1} parent=15 // pred_check
          %p588 = pneg %p283
        $region50: #{tpu_custom_call.1} parent=15 // pred_check_branch
          %590 = sbr.rel (%p588) target = $region52
        $region51: #{tpu_custom_call.1} parent=15 // pred_region
          %s591 = sand.u32 %s43, 1
          %s592 = scalar_lea.sflag [#allocation18], %s591
          %s593 = sand.u32 %s273, 1
          %s594 = scalar_lea.vmem [#allocation19], %s593
          %s596 = ssub.s32 16, 16
          %597 = vsyncadd %s592, %s596
          %s598 = smul.addr %s51, 16
          %s599 = scalar_lea.hbm %s8, %s598
          %s601 = sshll.u32 %s594, 4
          %s602 = int_to_ptr.vmem [resolvable:$true] %s601
          %604 = dma.hbm_to_vmem [thread:$0]  %s599, 16, %s602, %s592
        $region52: #{tpu_custom_call.1} parent=15 // pred_fallthru
          _
        // Predicated region
        $region53: #{tpu_custom_call.1} parent=15 // pred_check
          %p605 = pneg %p309
        $region54: #{tpu_custom_call.1} parent=15 // pred_check_branch
          %607 = sbr.rel (%p605) target = $region56
        $region55: #{tpu_custom_call.1} parent=15 // pred_region
          %s608 = sand.u32 %s43, 1
          %s609 = scalar_lea.sflag [#allocation21], %s608
          %s610 = sand.u32 %s299, 1
          %s611 = smul.addr %s610, 64
          %s612 = scalar_lea.vmem [#allocation20], %s611
          %s614 = ssub.s32 1024, 1024
          %615 = vsyncadd %s609, %s614
          %s616 = smul.addr %s51, 16
          %s617 = smul.addr %s616, 64
          %s618 = scalar_lea.hbm %s9, %s617
          %s619 = sshll.u32 %s612, 4
          %s620 = int_to_ptr.vmem [resolvable:$true] %s619
          %625 = dma.hbm_to_vmem [thread:$0]  %s618, 1024, %s620, %s609, 128, 128, 8
        $region56: #{tpu_custom_call.1} parent=15 // pred_fallthru
          _
        // Predicated region
        $region57: #{tpu_custom_call.1} parent=15 // pred_check
          %p626 = pneg %p335
        $region58: #{tpu_custom_call.1} parent=15 // pred_check_branch
          %628 = sbr.rel (%p626) target = $region60
        $region59: #{tpu_custom_call.1} parent=15 // pred_region
          %s629 = sand.u32 %s43, 1
          %s630 = scalar_lea.sflag [#allocation21], %s629
          %s631 = sand.u32 %s325, 1
          %s632 = smul.addr %s631, 2
          %s633 = scalar_lea.vmem [#allocation22], %s632
          %s635 = ssub.s32 32, 32
          %636 = vsyncadd %s630, %s635
          %s637 = smul.addr %s51, 2
          %s638 = smul.addr %s637, 16
          %s639 = scalar_lea.hbm %s10, %s638
          %s641 = sshll.u32 %s633, 4
          %s642 = int_to_ptr.vmem [resolvable:$true] %s641
          %644 = dma.hbm_to_vmem [thread:$0]  %s639, 32, %s642, %s630
        $region60: #{tpu_custom_call.1} parent=15 // pred_fallthru
          _
        // Predicated region
        $region61: #{tpu_custom_call.1} parent=15 // pred_check
          %p645 = pneg %p361
        $region62: #{tpu_custom_call.1} parent=15 // pred_check_branch
          %647 = sbr.rel (%p645) target = $region64
        $region63: #{tpu_custom_call.1} parent=15 // pred_region
          %s648 = sand.u32 %s43, 1
          %s649 = scalar_lea.sflag [#allocation24], %s648
          %s650 = sand.u32 %s351, 1
          %s651 = smul.addr %s650, 128
          %s652 = scalar_lea.vmem [#allocation23], %s651
          %s654 = ssub.s32 2048, 2048
          %655 = vsyncadd %s649, %s654
          %s656 = smul.addr %s51, 32
          %s657 = smul.addr %s656, 64
          %s658 = scalar_lea.hbm %s11, %s657
          %s659 = sshll.u32 %s652, 4
          %s660 = int_to_ptr.vmem [resolvable:$true] %s659
          %665 = dma.hbm_to_vmem [thread:$0]  %s658, 2048, %s660, %s649, 64, 64, 4
        $region64: #{tpu_custom_call.1} parent=15 // pred_fallthru
          _
        // Predicated region
        $region65: #{tpu_custom_call.1} parent=15 // pred_check
          %p666 = pneg %p387
        $region66: #{tpu_custom_call.1} parent=15 // pred_check_branch
          %668 = sbr.rel (%p666) target = $region68
        $region67: #{tpu_custom_call.1} parent=15 // pred_region
          %s669 = sand.u32 %s43, 1
          %s670 = scalar_lea.sflag [#allocation24], %s669
          %s671 = sand.u32 %s377, 1
          %s672 = scalar_lea.vmem [#allocation25], %s671
          %s674 = ssub.s32 16, 16
          %675 = vsyncadd %s670, %s674
          %s676 = smul.addr %s51, 16
          %s677 = scalar_lea.hbm %s12, %s676
          %s679 = sshll.u32 %s672, 4
          %s680 = int_to_ptr.vmem [resolvable:$true] %s679
          %682 = dma.hbm_to_vmem [thread:$0]  %s677, 16, %s680, %s670
        $region68: #{tpu_custom_call.1} parent=15 // pred_fallthru
          _
      $region16: #{tpu_custom_call.1} parent=5 // pred_fallthru
        _
      %p683 = scmp.le.s32.totalorder 1, %s43
      %p684 = scmp.lt.s32.totalorder %s43, 5
      %p685 = pnand %p683, %p684
      %p686 = pneg %p685
      // Predicated region
      $region69: #{tpu_custom_call.1} parent=5 // pred_check
        _
      $region70: #{tpu_custom_call.1} parent=5 // pred_check_branch
        %688 = sbr.rel (%p685) target = $region72
      $region71: #{tpu_custom_call.1} parent=5 // pred_region
        %s689 = ssub.s32 %s43, 1
        %s690 = sand.u32 %s68, 1
        %s691 = scalar_lea.sflag [#allocation6], %s690
        %s692 = sand.u32 %s68, 1
        %s693 = smul.addr %s692, 16
        %s694 = scalar_lea.vmem [#allocation5], %s693
        // Predicated region
        $region73: #{tpu_custom_call.1} parent=71 // pred_check
          %p695 = pneg %p81
        $region74: #{tpu_custom_call.1} parent=71 // pred_check_branch
          %697 = sbr.rel (%p695) target = $region76
        $region75: #{tpu_custom_call.1} parent=71 // pred_region
          %698 = dma.done %s691, 256
        $region76: #{tpu_custom_call.1} parent=71 // pred_fallthru
          _
        %s699 = sand.u32 %s48, 1
        %s700 = scalar_lea.sflag [#allocation9], %s699
        %s701 = sand.u32 %s94, 1
        %s702 = scalar_lea.vmem [#allocation8], %s701
        // Predicated region
        $region77: #{tpu_custom_call.1} parent=71 // pred_check
          %p703 = pneg %p107
        $region78: #{tpu_custom_call.1} parent=71 // pred_check_branch
          %705 = sbr.rel (%p703) target = $region80
        $region79: #{tpu_custom_call.1} parent=71 // pred_region
          %706 = dma.done %s700, 16
        $region80: #{tpu_custom_call.1} parent=71 // pred_fallthru
          _
        %s707 = sand.u32 %s48, 1
        %s708 = scalar_lea.sflag [#allocation9], %s707
        %s709 = sand.u32 %s120, 1
        %s710 = scalar_lea.vmem [#allocation10], %s709
        // Predicated region
        $region81: #{tpu_custom_call.1} parent=71 // pred_check
          %p711 = pneg %p133
        $region82: #{tpu_custom_call.1} parent=71 // pred_check_branch
          %713 = sbr.rel (%p711) target = $region84
        $region83: #{tpu_custom_call.1} parent=71 // pred_region
          %714 = dma.done %s708, 16
        $region84: #{tpu_custom_call.1} parent=71 // pred_fallthru
          _
        %s715 = sand.u32 %s48, 1
        %s716 = scalar_lea.sflag [#allocation12], %s715
        %s717 = sand.u32 %s146, 1
        %s718 = smul.addr %s717, 64
        %s719 = scalar_lea.vmem [#allocation11], %s718
        // Predicated region
        $region85: #{tpu_custom_call.1} parent=71 // pred_check
          %p720 = pneg %p159
        $region86: #{tpu_custom_call.1} parent=71 // pred_check_branch
          %722 = sbr.rel (%p720) target = $region88
        $region87: #{tpu_custom_call.1} parent=71 // pred_region
          %723 = dma.done %s716, 1024
        $region88: #{tpu_custom_call.1} parent=71 // pred_fallthru
          _
        %s724 = sand.u32 %s48, 1
        %s725 = scalar_lea.sflag [#allocation12], %s724
        %s726 = sand.u32 %s172, 1
        %s727 = smul.addr %s726, 2
        %s728 = scalar_lea.vmem [#allocation13], %s727
        // Predicated region
        $region89: #{tpu_custom_call.1} parent=71 // pred_check
          %p729 = pneg %p185
        $region90: #{tpu_custom_call.1} parent=71 // pred_check_branch
          %731 = sbr.rel (%p729) target = $region92
        $region91: #{tpu_custom_call.1} parent=71 // pred_region
          %732 = dma.done %s725, 32
        $region92: #{tpu_custom_call.1} parent=71 // pred_fallthru
          _
        %s733 = sand.u32 %s48, 1
        %s734 = scalar_lea.sflag [#allocation15], %s733
        %s735 = sand.u32 %s198, 1
        %s736 = smul.addr %s735, 32
        %s737 = scalar_lea.vmem [#allocation14], %s736
        // Predicated region
        $region93: #{tpu_custom_call.1} parent=71 // pred_check
          %p738 = pneg %p211
        $region94: #{tpu_custom_call.1} parent=71 // pred_check_branch
          %740 = sbr.rel (%p738) target = $region96
        $region95: #{tpu_custom_call.1} parent=71 // pred_region
          %741 = dma.done %s734, 512
        $region96: #{tpu_custom_call.1} parent=71 // pred_fallthru
          _
        %s742 = sand.u32 %s48, 1
        %s743 = scalar_lea.sflag [#allocation15], %s742
        %s744 = sand.u32 %s224, 1
        %s745 = scalar_lea.vmem [#allocation16], %s744
        // Predicated region
        $region97: #{tpu_custom_call.1} parent=71 // pred_check
          %p746 = pneg %p237
        $region98: #{tpu_custom_call.1} parent=71 // pred_check_branch
          %748 = sbr.rel (%p746) target = $region100
        $region99: #{tpu_custom_call.1} parent=71 // pred_region
          %749 = dma.done %s743, 16
        $region100: #{tpu_custom_call.1} parent=71 // pred_fallthru
          _
        %s750 = sand.u32 %s48, 1
        %s751 = scalar_lea.sflag [#allocation18], %s750
        %s752 = sand.u32 %s250, 1
        %s753 = scalar_lea.vmem [#allocation17], %s752
        // Predicated region
        $region101: #{tpu_custom_call.1} parent=71 // pred_check
          %p754 = pneg %p263
        $region102: #{tpu_custom_call.1} parent=71 // pred_check_branch
          %756 = sbr.rel (%p754) target = $region104
        $region103: #{tpu_custom_call.1} parent=71 // pred_region
          %757 = dma.done %s751, 16
        $region104: #{tpu_custom_call.1} parent=71 // pred_fallthru
          _
        %s758 = sand.u32 %s48, 1
        %s759 = scalar_lea.sflag [#allocation18], %s758
        %s760 = sand.u32 %s276, 1
        %s761 = scalar_lea.vmem [#allocation19], %s760
        // Predicated region
        $region105: #{tpu_custom_call.1} parent=71 // pred_check
          %p762 = pneg %p289
        $region106: #{tpu_custom_call.1} parent=71 // pred_check_branch
          %764 = sbr.rel (%p762) target = $region108
        $region107: #{tpu_custom_call.1} parent=71 // pred_region
          %765 = dma.done %s759, 16
        $region108: #{tpu_custom_call.1} parent=71 // pred_fallthru
          _
        %s766 = sand.u32 %s48, 1
        %s767 = scalar_lea.sflag [#allocation21], %s766
        %s768 = sand.u32 %s302, 1
        %s769 = smul.addr %s768, 64
        %s770 = scalar_lea.vmem [#allocation20], %s769
        // Predicated region
        $region109: #{tpu_custom_call.1} parent=71 // pred_check
          %p771 = pneg %p315
        $region110: #{tpu_custom_call.1} parent=71 // pred_check_branch
          %773 = sbr.rel (%p771) target = $region112
        $region111: #{tpu_custom_call.1} parent=71 // pred_region
          %774 = dma.done %s767, 1024
        $region112: #{tpu_custom_call.1} parent=71 // pred_fallthru
          _
        %s775 = sand.u32 %s48, 1
        %s776 = scalar_lea.sflag [#allocation21], %s775
        %s777 = sand.u32 %s328, 1
        %s778 = smul.addr %s777, 2
        %s779 = scalar_lea.vmem [#allocation22], %s778
        // Predicated region
        $region113: #{tpu_custom_call.1} parent=71 // pred_check
          %p780 = pneg %p341
        $region114: #{tpu_custom_call.1} parent=71 // pred_check_branch
          %782 = sbr.rel (%p780) target = $region116
        $region115: #{tpu_custom_call.1} parent=71 // pred_region
          %783 = dma.done %s776, 32
        $region116: #{tpu_custom_call.1} parent=71 // pred_fallthru
          _
        %s784 = sand.u32 %s48, 1
        %s785 = scalar_lea.sflag [#allocation24], %s784
        %s786 = sand.u32 %s354, 1
        %s787 = smul.addr %s786, 128
        %s788 = scalar_lea.vmem [#allocation23], %s787
        // Predicated region
        $region117: #{tpu_custom_call.1} parent=71 // pred_check
          %p789 = pneg %p367
        $region118: #{tpu_custom_call.1} parent=71 // pred_check_branch
          %791 = sbr.rel (%p789) target = $region120
        $region119: #{tpu_custom_call.1} parent=71 // pred_region
          %792 = dma.done %s785, 2048
        $region120: #{tpu_custom_call.1} parent=71 // pred_fallthru
          _
        %s793 = sand.u32 %s48, 1
        %s794 = scalar_lea.sflag [#allocation24], %s793
        %s795 = sand.u32 %s380, 1
        %s796 = scalar_lea.vmem [#allocation25], %s795
        // Predicated region
        $region121: #{tpu_custom_call.1} parent=71 // pred_check
          %p797 = pneg %p393
        $region122: #{tpu_custom_call.1} parent=71 // pred_check_branch
          %799 = sbr.rel (%p797) target = $region124
        $region123: #{tpu_custom_call.1} parent=71 // pred_region
          %800 = dma.done %s794, 16
        $region124: #{tpu_custom_call.1} parent=71 // pred_fallthru
          _
        %s801 = sand.u32 %s68, 1
        %s802 = scalar_lea.sflag [#allocation6], %s801
        %s803 = sand.u32 %s68, 1
        %s804 = smul.addr %s803, 16
        %s805 = scalar_lea.vmem [#allocation5], %s804
        %p806 = pneg %p81
        %p807 = pneg %p78
        %s808 = sand.u32 %s48, 1
        %s809 = scalar_lea.sflag [#allocation9], %s808
        %s810 = sand.u32 %s94, 1
        %s811 = scalar_lea.vmem [#allocation8], %s810
        %p812 = pneg %p107
        %p813 = pneg %p104
        %s814 = sand.u32 %s48, 1
        %s815 = scalar_lea.sflag [#allocation9], %s814
        %s816 = sand.u32 %s120, 1
        %s817 = scalar_lea.vmem [#allocation10], %s816
        %p818 = pneg %p133
        %p819 = pneg %p130
        %s820 = sand.u32 %s48, 1
        %s821 = scalar_lea.sflag [#allocation12], %s820
        %s822 = sand.u32 %s146, 1
        %s823 = smul.addr %s822, 64
        %s824 = scalar_lea.vmem [#allocation11], %s823
        %p825 = pneg %p159
        %p826 = pneg %p156
        %s827 = sand.u32 %s48, 1
        %s828 = scalar_lea.sflag [#allocation12], %s827
        %s829 = sand.u32 %s172, 1
        %s830 = smul.addr %s829, 2
        %s831 = scalar_lea.vmem [#allocation13], %s830
        %p832 = pneg %p185
        %p833 = pneg %p182
        %s834 = sand.u32 %s48, 1
        %s835 = scalar_lea.sflag [#allocation15], %s834
        %s836 = sand.u32 %s198, 1
        %s837 = smul.addr %s836, 32
        %s838 = scalar_lea.vmem [#allocation14], %s837
        %p839 = pneg %p211
        %p840 = pneg %p208
        %s841 = sand.u32 %s48, 1
        %s842 = scalar_lea.sflag [#allocation15], %s841
        %s843 = sand.u32 %s224, 1
        %s844 = scalar_lea.vmem [#allocation16], %s843
        %p845 = pneg %p237
        %p846 = pneg %p234
        %s847 = sand.u32 %s48, 1
        %s848 = scalar_lea.sflag [#allocation18], %s847
        %s849 = sand.u32 %s250, 1
        %s850 = scalar_lea.vmem [#allocation17], %s849
        %p851 = pneg %p263
        %p852 = pneg %p260
        %s853 = sand.u32 %s48, 1
        %s854 = scalar_lea.sflag [#allocation18], %s853
        %s855 = sand.u32 %s276, 1
        %s856 = scalar_lea.vmem [#allocation19], %s855
        %p857 = pneg %p289
        %p858 = pneg %p286
        %s859 = sand.u32 %s48, 1
        %s860 = scalar_lea.sflag [#allocation21], %s859
        %s861 = sand.u32 %s302, 1
        %s862 = smul.addr %s861, 64
        %s863 = scalar_lea.vmem [#allocation20], %s862
        %p864 = pneg %p315
        %p865 = pneg %p312
        %s866 = sand.u32 %s48, 1
        %s867 = scalar_lea.sflag [#allocation21], %s866
        %s868 = sand.u32 %s328, 1
        %s869 = smul.addr %s868, 2
        %s870 = scalar_lea.vmem [#allocation22], %s869
        %p871 = pneg %p341
        %p872 = pneg %p338
        %s873 = sand.u32 %s48, 1
        %s874 = scalar_lea.sflag [#allocation24], %s873
        %s875 = sand.u32 %s354, 1
        %s876 = smul.addr %s875, 128
        %s877 = scalar_lea.vmem [#allocation23], %s876
        %p878 = pneg %p367
        %p879 = pneg %p364
        %s880 = sand.u32 %s48, 1
        %s881 = scalar_lea.sflag [#allocation24], %s880
        %s882 = sand.u32 %s380, 1
        %s883 = scalar_lea.vmem [#allocation25], %s882
        %p884 = pneg %p393
        %p885 = pneg %p390
        %p886 = pneg %p419
        %p887 = pneg %p416
        %s888 = sand.u32 %s406, 1
        %s889 = scalar_lea.sflag [#allocation7], %s888
        %s890 = sand.u32 %s406, 1
        %s891 = smul.addr %s890, 16
        %s892 = scalar_lea.vmem [#allocation26], %s891
        %p894 = scmp.eq.s32.totalorder %s53, 0
        // Predicated region
        $region125: #{tpu_custom_call.1} parent=71 // pred_check
          %p895 = pneg %p894
        $region126: #{tpu_custom_call.1} parent=71 // pred_check_branch
          %897 = sbr.rel (%p895) target = $region128
        $region127: #{tpu_custom_call.1} parent=71 // pred_region
          %v898 = vld [vmem:[%s694] sm:$0xff]
          %v899 = vld [vmem:[%s694 + $0x8] sm:$0xff]
          %vm900 = vcmask 523264
          %901 = vst.msk [vmem:[%s892] sm:$0xff] %vm900, %v898
          %902 = vst.msk [vmem:[%s892 + $0x8] sm:$0xff] %vm900, %v899
        $region128: #{tpu_custom_call.1} parent=71 // pred_fallthru
          _
        %v903 = vld [vmem:[%s892] sm:$0xff]
        %v904 = vld [vmem:[%s892 + $0x8] sm:$0xff]
        %v905 = vld [vmem:[%s702] sm:$0x1]
        %v906 = vld [vmem:[%s710] sm:$0x1]
        %vm907 = vcmask 523264
        %v908 = vsel %vm907, %v903, 0.0
        %909 = vadd.xlane.f32.xlu0 %v908
        %v910 = vpop.xlane.xlu0 %909
        %v911 = vsel %vm907, %v904, 0.0
        %912 = vadd.xlane.f32.xlu0 %v911
        %v913 = vpop.xlane.xlu0 %912
        %v914 = vrcp.pop 64.0
        %v915 = vmul.f32 %v910, %v914
        %v916 = vmul.f32 %v913, %v914
        %v917 = vsub.f32 %v903, %v915
        %v918 = vsub.f32 %v904, %v916
        %v919 = vmul.f32 %v917, %v917
        %v920 = vmul.f32 %v918, %v918
        %v921 = vsel %vm907, %v919, 0.0
        %922 = vadd.xlane.f32.xlu0 %v921
        %v923 = vpop.xlane.xlu0 %922
        %v924 = vsel %vm907, %v920, 0.0
        %925 = vadd.xlane.f32.xlu0 %v924
        %v926 = vpop.xlane.xlu0 %925
        %v927 = vmul.f32 %v923, %v914
        %v928 = vmul.f32 %v926, %v914
        %v929 = vadd.f32 %v927, 1e-05
        %v930 = vadd.f32 %v928, 1e-05
        %v931 = vrsqrt.pop %v929
        %v932 = vrsqrt.pop %v930
        %v933 = vmul.f32 %v917, %v931
        %v934 = vmul.f32 %v918, %v932
        %v936 = vlaneseq
        %v937 = vshrl.u32 %v936, 7
        %v938 = vsub.s32 0, %v937
        %v939 = vrot.slane %v905, %v938
        %v941 = vmul.f32 %v933, %v939
        %v942 = vmul.f32 %v934, %v939
        %v944 = vlaneseq
        %v945 = vshrl.u32 %v944, 7
        %v946 = vsub.s32 0, %v945
        %v947 = vrot.slane %v906, %v946
        %v949 = vadd.f32 %v941, %v947
        %v950 = vadd.f32 %v942, %v947
        %v951 = vpack.c.bf16 %v950, %v949
        %v952 = vld [vmem:[%s719] sm:$0xff]
        %v953 = vld [vmem:[%s719 + $0x8] sm:$0xff]
        %v954 = vld [vmem:[%s719 + $0x10] sm:$0xff]
        %v955 = vld [vmem:[%s719 + $0x18] sm:$0xff]
        %v956 = vld [vmem:[%s719 + $0x20] sm:$0xff]
        %v957 = vld [vmem:[%s719 + $0x28] sm:$0xff]
        %v958 = vld [vmem:[%s719 + $0x30] sm:$0xff]
        %v959 = vld [vmem:[%s719 + $0x38] sm:$0xff]
        %v960 = vld [vmem:[%s728] sm:$0x3]
        %v962 = vlaneseq
        %v963 = vshrl.u32 %v962, 7
        %v964 = vsub.s32 0, %v963
        %v965 = vrot.slane %v960, %v964
        %v966 = vlaneseq
        %v967 = vshrl.u32 %v966, 7
        %v968 = vsub.s32 1, %v967
        %v969 = vrot.slane %v960, %v968
        %v980 = vunpack.c.l.b16 %v952
        %v981 = vunpack.c.h.b16 %v952
        %v982 = vunpack.c.l.b16 %v953
        %v983 = vunpack.c.h.b16 %v953
        %v984 = vunpack.c.l.b16 %v954
        %v985 = vunpack.c.h.b16 %v954
        %v986 = vunpack.c.l.b16 %v955
        %v987 = vunpack.c.h.b16 %v955
        %v988 = vunpack.c.l.b16 %v956
        %v989 = vunpack.c.h.b16 %v956
        %v990 = vunpack.c.l.b16 %v957
        %v991 = vunpack.c.h.b16 %v957
        %v992 = vunpack.c.l.b16 %v958
        %v993 = vunpack.c.h.b16 %v958
        %v994 = vunpack.c.l.b16 %v959
        %v995 = vunpack.c.h.b16 %v959
        %v996 = vpack.c.b16 %v982, %v980
        %v997 = vpack.c.b16 %v983, %v981
        %v998 = vpack.c.b16 %v986, %v984
        %v999 = vpack.c.b16 %v987, %v985
        %v1000 = vpack.c.b16 %v990, %v988
        %v1001 = vpack.c.b16 %v991, %v989
        %v1002 = vpack.c.b16 %v994, %v992
        %v1003 = vpack.c.b16 %v995, %v993
        %v1013 = vsel %vm907, %v951, 0
        %1015 = vmatprep.subr.bf16.mxu0 %v997
        %1016 = vmatpush1.bf16.msra.mxu0 %v996
        %1017 = vmatprep.subr.bf16.mxu0 %v999
        %1018 = vmatpush1.bf16.msra.mxu0 %v998
        %1019 = vmatprep.subr.bf16.mxu0 %v1001
        %1020 = vmatpush1.bf16.msra.mxu0 %v1000
        %1021 = vmatprep.subr.bf16.mxu0 %v1003
        %1022 = vmatpush1.bf16.msra.mxu0 %v1002
        %1023 = vmatprep.subr.bf16.mxu0 0
        %1024 = vmatpush1.bf16.msra.mxu0 0
        %1025 = vmatprep.subr.bf16.mxu0 0
        %1026 = vmatpush1.bf16.msra.mxu0 0
        %1027 = vmatprep.subr.bf16.mxu0 0
        %1028 = vmatpush1.bf16.msra.mxu0 0
        %1029 = vmatprep.subr.bf16.mxu0 0
        %1030 = vmatpush1.bf16.msra.mxu0 0
        %1031 = vmatprep.subr.bf16.mxu0 0
        %1032 = vmatpush1.bf16.msra.mxu0 0
        %1033 = vmatprep.subr.bf16.mxu0 0
        %1034 = vmatpush1.bf16.msra.mxu0 0
        %1035 = vmatprep.subr.bf16.mxu0 0
        %1036 = vmatpush1.bf16.msra.mxu0 0
        %1037 = vmatprep.subr.bf16.mxu0 0
        %1038 = vmatpush1.bf16.msra.mxu0 0
        %1039 = vmatprep.subr.bf16.mxu0 0
        %1040 = vmatpush1.bf16.msra.mxu0 0
        %1041 = vmatprep.subr.bf16.mxu0 0
        %1042 = vmatpush1.bf16.msra.mxu0 0
        %1043 = vmatprep.subr.bf16.mxu0 0
        %1044 = vmatpush1.bf16.msra.mxu0 0
        %1045 = vmatprep.subr.bf16.mxu0 0
        %1046 = vmatpush1.bf16.msra.mxu0 0
        %1047 = vmatprep.mubr.bf16.mxu0 0
        %1048 = vmatmul.mubr.bf16.gmra.mrb[0].mxu0 %v1013
        %v1049 = vpop.f32.mrb[0].mxu0
        %v1050 = vadd.f32 %v965, %v1049
        %v1051 = vpop.f32.mrb[0].mxu0
        %v1052 = vadd.f32 %v969, %v1051
        %v1053 = vpop.f32.mrb[0].mxu0
        %v1054 = vadd.f32 %v965, %v1053
        %v1055 = vpop.f32.mrb[0].mxu0
        %v1056 = vadd.f32 %v969, %v1055
        %1057 = vdwg.mxu0
        %v1058 = vmul.f32 %v1050, 0.25
        %v1059 = vmul.f32 %v1054, 0.25
        %v1060 = vpack.c.bf16 %v1059, %v1058
        %vm1061 = vcmask 130048
        %1062 = vst.msk [vmem:[#allocation2] sm:$0xff] %vm1061, %v1060
        %v1063 = vpack.c.bf16 %v1054, %v1050
        %1065 = vrot.lane.b32.xlu0 %v1063, 64
        %v1066 = vpop.permute.xlu0 %1065
        %1068 = vst.msk [vmem:[#allocation3] sm:$0xff] %vm1061, %v1066
        %v1069 = vpack.c.bf16 %v1056, %v1052
        %1070 = vst.msk [vmem:[#allocation4] sm:$0xff] %vm1061, %v1069
        %1072 = vrot.lane.b32.xlu0 %v1060, 112
        %v1073 = vpop.permute.xlu0 %1072
        %s1075 = scalar_lea.vmem [#allocation2], 8
        %1076 = vst.msk [vmem:[%s1075] sm:$0xff] %vm1061, %v1073
        %1077 = vrot.lane.b32.xlu0 %v1063, 48
        %v1078 = vpop.permute.xlu0 %1077
        %s1080 = scalar_lea.vmem [#allocation3], 8
        %1081 = vst.msk [vmem:[%s1080] sm:$0xff] %vm1061, %v1078
        %1083 = vrot.lane.b32.xlu0 %v1069, 112
        %v1084 = vpop.permute.xlu0 %1083
        %s1086 = scalar_lea.vmem [#allocation4], 8
        %1087 = vst.msk [vmem:[%s1086] sm:$0xff] %vm1061, %v1084
        %1088 = vrot.lane.b32.xlu0 %v1060, 96
        %v1089 = vpop.permute.xlu0 %1088
        %s1091 = scalar_lea.vmem [#allocation2], 16
        %1092 = vst.msk [vmem:[%s1091] sm:$0xff] %vm1061, %v1089
        %1093 = vrot.lane.b32.xlu0 %v1063, 32
        %v1094 = vpop.permute.xlu0 %1093
        %s1096 = scalar_lea.vmem [#allocation3], 16
        %1097 = vst.msk [vmem:[%s1096] sm:$0xff] %vm1061, %v1094
        %1098 = vrot.lane.b32.xlu0 %v1069, 96
        %v1099 = vpop.permute.xlu0 %1098
        %s1101 = scalar_lea.vmem [#allocation4], 16
        %1102 = vst.msk [vmem:[%s1101] sm:$0xff] %vm1061, %v1099
        %1103 = vrot.lane.b32.xlu0 %v1060, 80
        %v1104 = vpop.permute.xlu0 %1103
        %s1106 = scalar_lea.vmem [#allocation2], 24
        %1107 = vst.msk [vmem:[%s1106] sm:$0xff] %vm1061, %v1104
        %1108 = vrot.lane.b32.xlu0 %v1063, 16
        %v1109 = vpop.permute.xlu0 %1108
        %s1111 = scalar_lea.vmem [#allocation3], 24
        %1112 = vst.msk [vmem:[%s1111] sm:$0xff] %vm1061, %v1109
        %1113 = vrot.lane.b32.xlu0 %v1069, 80
        %v1114 = vpop.permute.xlu0 %1113
        %s1116 = scalar_lea.vmem [#allocation4], 24
        %1117 = vst.msk [vmem:[%s1116] sm:$0xff] %vm1061, %v1114
        %v1118 = vlaneseq
        %v1119 = vshrl.u32 %v1118, 7
        %v1120 = vadd.s32 %v1119, 8
        %v1121 = vlaneseq
        %v1122 = vand.u32 %v1121, 127
        %vm1123 = vcmp.ge.s32.totalorder %v1119, %v1122
        %vm1124 = vcmp.ge.s32.totalorder %v1120, %v1122
        loop: start=0, step=1, limit=4
        $region129: #{tpu_custom_call.1} parent=71 // loop_pre_header
          _
        $region130: #{tpu_custom_call.1} parent=71 // loop_header
          %s1126 = sphi 0, %s1130
          %p1127 = scmp.ge.s32.totalorder %s1126, 4
          %v1131 = vphi 0.0, %v1314
          %v1132 = vphi 0.0, %v1315
        $region131: #{tpu_custom_call.1} parent=71 // loop_header_branch
          %1129 = sbr.rel (%p1127) target = $region135
        $region132: #{tpu_custom_call.1} parent=71 // loop_body
          %s1133 = smul.addr %s1126, 8
          %s1134 = scalar_lea.vmem [#allocation2], %s1133
          %v1135 = vld [vmem:[%s1134] sm:$0xff]
          %s1136 = smul.addr %s1126, 8
          %s1137 = scalar_lea.vmem [#allocation3], %s1136
          %v1138 = vld [vmem:[%s1137] sm:$0xff]
          %s1139 = smul.addr %s1126, 8
          %s1140 = scalar_lea.vmem [#allocation4], %s1139
          %v1141 = vld [vmem:[%s1140] sm:$0xff]
          %v1143 = vsel %vm1061, %v1135, 0
          %v1146 = vsel %vm1061, %v1138, 0
          %1148 = vmatprep.subr.bf16.mxu0 0
          %1149 = vmatpush1.bf16.xpose.msra.mxu0 %v1146
          %1150 = vmatprep.subr.bf16.mxu0 0
          %1151 = vmatpush1.bf16.xpose.msra.mxu0 0
          %1152 = vmatprep.subr.bf16.mxu0 0
          %1153 = vmatpush1.bf16.xpose.msra.mxu0 0
          %1154 = vmatprep.subr.bf16.mxu0 0
          %1155 = vmatpush1.bf16.xpose.msra.mxu0 0
          %1156 = vmatprep.subr.bf16.mxu0 0
          %1157 = vmatpush1.bf16.xpose.msra.mxu0 0
          %1158 = vmatprep.subr.bf16.mxu0 0
          %1159 = vmatpush1.bf16.xpose.msra.mxu0 0
          %1160 = vmatprep.subr.bf16.mxu0 0
          %1161 = vmatpush1.bf16.xpose.msra.mxu0 0
          %1162 = vmatprep.subr.bf16.mxu0 0
          %1163 = vmatpush1.bf16.xpose.msra.mxu0 0
          %1164 = vmatprep.subr.bf16.mxu0 0
          %1165 = vmatpush1.bf16.xpose.msra.mxu0 0
          %1166 = vmatprep.subr.bf16.mxu0 0
          %1167 = vmatpush1.bf16.xpose.msra.mxu0 0
          %1168 = vmatprep.subr.bf16.mxu0 0
          %1169 = vmatpush1.bf16.xpose.msra.mxu0 0
          %1170 = vmatprep.subr.bf16.mxu0 0
          %1171 = vmatpush1.bf16.xpose.msra.mxu0 0
          %1172 = vmatprep.subr.bf16.mxu0 0
          %1173 = vmatpush1.bf16.xpose.msra.mxu0 0
          %1174 = vmatprep.subr.bf16.mxu0 0
          %1175 = vmatpush1.bf16.xpose.msra.mxu0 0
          %1176 = vmatprep.subr.bf16.mxu0 0
          %1177 = vmatpush1.bf16.xpose.msra.mxu0 0
          %1178 = vmatprep.subr.bf16.mxu0 0
          %1179 = vmatpush1.bf16.xpose.msra.mxu0 0
          %1180 = vmatprep.mubr.bf16.mxu0 0
          %1181 = vmatmul.mubr.bf16.gmra.mrb[0].mxu0 %v1143
          %v1182 = vpop.f32.mrb[0].mxu0
          %v1183 = vadd.f32 0.0, %v1182
          %v1184 = vpop.f32.mrb[0].mxu0
          %v1185 = vpop.f32.mrb[0].mxu0
          %v1186 = vadd.f32 0.0, %v1185
          %v1187 = vpop.f32.mrb[0].mxu0
          %1188 = vdwg.mxu0
          %v1189 = vsel %vm1123, %v1183, -inf
          %v1190 = vsel %vm1124, %v1186, -inf
          %v1191 = vsel %vm1061, %v1189, -inf
          %1192 = vmax.xlane.f32.xlu0 %v1191
          %v1193 = vpop.xlane.xlu0 %1192
          %v1194 = vsel %vm1061, %v1190, -inf
          %1195 = vmax.xlane.f32.xlu0 %v1194
          %v1196 = vpop.xlane.xlu0 %1195
          %v1197 = vsub.f32 %v1189, %v1193
          %v1198 = vsub.f32 %v1190, %v1196
          %v1199 = vmul.f32 %v1197, 1.442695
          %v1200 = vpow.pop %v1199
          %v1201 = vmul.f32 %v1198, 1.442695
          %v1202 = vpow.pop %v1201
          %v1203 = vsel %vm1061, %v1200, 0.0
          %1204 = vadd.xlane.f32.xlu0 %v1203
          %v1205 = vpop.xlane.xlu0 %1204
          %v1206 = vsel %vm1061, %v1202, 0.0
          %1207 = vadd.xlane.f32.xlu0 %v1206
          %v1208 = vpop.xlane.xlu0 %1207
          %v1209 = vrcp.pop %v1205
          %v1210 = vrcp.pop %v1208
          %v1211 = vmul.f32 %v1200, %v1209
          %v1212 = vmul.f32 %v1202, %v1210
          %v1213 = vpack.c.bf16 %v1212, %v1211
          %v1215 = vsel %vm1061, %v1213, 0
          %1217 = vmatprep.subr.bf16.mxu0 0
          %1218 = vmatpush1.bf16.msra.mxu0 %v1141
          %1219 = vmatprep.subr.bf16.mxu0 0
          %1220 = vmatpush1.bf16.msra.mxu0 0
          %1221 = vmatprep.subr.bf16.mxu0 0
          %1222 = vmatpush1.bf16.msra.mxu0 0
          %1223 = vmatprep.subr.bf16.mxu0 0
          %1224 = vmatpush1.bf16.msra.mxu0 0
          %1225 = vmatprep.subr.bf16.mxu0 0
          %1226 = vmatpush1.bf16.msra.mxu0 0
          %1227 = vmatprep.subr.bf16.mxu0 0
          %1228 = vmatpush1.bf16.msra.mxu0 0
          %1229 = vmatprep.subr.bf16.mxu0 0
          %1230 = vmatpush1.bf16.msra.mxu0 0
          %1231 = vmatprep.subr.bf16.mxu0 0
          %1232 = vmatpush1.bf16.msra.mxu0 0
          %1233 = vmatprep.subr.bf16.mxu0 0
          %1234 = vmatpush1.bf16.msra.mxu0 0
          %1235 = vmatprep.subr.bf16.mxu0 0
          %1236 = vmatpush1.bf16.msra.mxu0 0
          %1237 = vmatprep.subr.bf16.mxu0 0
          %1238 = vmatpush1.bf16.msra.mxu0 0
          %1239 = vmatprep.subr.bf16.mxu0 0
          %1240 = vmatpush1.bf16.msra.mxu0 0
          %1241 = vmatprep.subr.bf16.mxu0 0
          %1242 = vmatpush1.bf16.msra.mxu0 0
          %1243 = vmatprep.subr.bf16.mxu0 0
          %1244 = vmatpush1.bf16.msra.mxu0 0
          %1245 = vmatprep.subr.bf16.mxu0 0
          %1246 = vmatpush1.bf16.msra.mxu0 0
          %1247 = vmatprep.subr.bf16.mxu0 0
          %1248 = vmatpush1.bf16.msra.mxu0 0
          %1249 = vmatprep.mubr.bf16.mxu0 0
          %1250 = vmatmul.mubr.bf16.gmra.mrb[0].mxu0 %v1215
          %v1251 = vpop.f32.mrb[0].mxu0
          %v1252 = vadd.f32 0.0, %v1251
          %v1253 = vpop.f32.mrb[0].mxu0
          %v1254 = vpop.f32.mrb[0].mxu0
          %v1255 = vadd.f32 0.0, %v1254
          %v1256 = vpop.f32.mrb[0].mxu0
          %1257 = vdwg.mxu0
          %v1258 = vpack.c.bf16 %v1255, %v1252
          %s1259 = smul.u32 %s1126, 2
          %s1260 = smul.addr %s1259, 4
          %s1261 = scalar_lea.vmem %s737, %s1260 [#allocation14]
          %v1262 = vld [vmem:[%s1261] sm:$0xf]
          %v1263 = vld [vmem:[%s1261 + $0x4] sm:$0xf]
          %v1266 = vunpack.c.l.b16 %v1262
          %v1267 = vunpack.c.l.b16 %v1263
          %v1268 = vpack.c.b16 %v1267, %v1266
          %v1271 = vsel %vm1061, %v1258, 0
          %1273 = vmatprep.subr.bf16.mxu0 0
          %1274 = vmatpush1.bf16.msra.mxu0 %v1268
          %1275 = vmatprep.subr.bf16.mxu0 0
          %1276 = vmatpush1.bf16.msra.mxu0 0
          %1277 = vmatprep.subr.bf16.mxu0 0
          %1278 = vmatpush1.bf16.msra.mxu0 0
          %1279 = vmatprep.subr.bf16.mxu0 0
          %1280 = vmatpush1.bf16.msra.mxu0 0
          %1281 = vmatprep.subr.bf16.mxu0 0
          %1282 = vmatpush1.bf16.msra.mxu0 0
          %1283 = vmatprep.subr.bf16.mxu0 0
          %1284 = vmatpush1.bf16.msra.mxu0 0
          %1285 = vmatprep.subr.bf16.mxu0 0
          %1286 = vmatpush1.bf16.msra.mxu0 0
          %1287 = vmatprep.subr.bf16.mxu0 0
          %1288 = vmatpush1.bf16.msra.mxu0 0
          %1289 = vmatprep.subr.bf16.mxu0 0
          %1290 = vmatpush1.bf16.msra.mxu0 0
          %1291 = vmatprep.subr.bf16.mxu0 0
          %1292 = vmatpush1.bf16.msra.mxu0 0
          %1293 = vmatprep.subr.bf16.mxu0 0
          %1294 = vmatpush1.bf16.msra.mxu0 0
          %1295 = vmatprep.subr.bf16.mxu0 0
          %1296 = vmatpush1.bf16.msra.mxu0 0
          %1297 = vmatprep.subr.bf16.mxu0 0
          %1298 = vmatpush1.bf16.msra.mxu0 0
          %1299 = vmatprep.subr.bf16.mxu0 0
          %1300 = vmatpush1.bf16.msra.mxu0 0
          %1301 = vmatprep.subr.bf16.mxu0 0
          %1302 = vmatpush1.bf16.msra.mxu0 0
          %1303 = vmatprep.subr.bf16.mxu0 0
          %1304 = vmatpush1.bf16.msra.mxu0 0
          %1305 = vmatprep.mubr.bf16.mxu0 0
          %1306 = vmatmul.mubr.bf16.gmra.mrb[0].mxu0 %v1271
          %v1307 = vpop.f32.mrb[0].mxu0
          %v1308 = vadd.f32 0.0, %v1307
          %v1309 = vpop.f32.mrb[0].mxu0
          %v1310 = vpop.f32.mrb[0].mxu0
          %v1311 = vadd.f32 0.0, %v1310
          %v1312 = vpop.f32.mrb[0].mxu0
          %1313 = vdwg.mxu0
          %v1314 = vadd.f32 %v1131, %v1308
          %v1315 = vadd.f32 %v1132, %v1311
        $region133: #{tpu_custom_call.1} parent=71 // loop_footer
          %s1130 = sadd.s32 1, %s1126
        $region134: #{tpu_custom_call.1} parent=71 // loop_footer_branch
          %1125 = sbr.rel target = $region130
        $region135: #{tpu_custom_call.1} parent=71 // loop_exit
          _
        %v1316 = vadd.f32 %v903, %v1131
        %v1317 = vadd.f32 %v904, %v1132
        %v1318 = vld [vmem:[%s745] sm:$0x1]
        %v1320 = vlaneseq
        %v1321 = vshrl.u32 %v1320, 7
        %v1322 = vsub.s32 0, %v1321
        %v1323 = vrot.slane %v1318, %v1322
        %v1325 = vadd.f32 %v1316, %v1323
        %v1326 = vadd.f32 %v1317, %v1323
        %v1327 = vld [vmem:[%s753] sm:$0x1]
        %v1328 = vld [vmem:[%s761] sm:$0x1]
        %v1329 = vsel %vm907, %v1325, 0.0
        %1330 = vadd.xlane.f32.xlu0 %v1329
        %v1331 = vpop.xlane.xlu0 %1330
        %v1332 = vsel %vm907, %v1326, 0.0
        %1333 = vadd.xlane.f32.xlu0 %v1332
        %v1334 = vpop.xlane.xlu0 %1333
        %v1335 = vmul.f32 %v1331, %v914
        %v1336 = vmul.f32 %v1334, %v914
        %v1337 = vsub.f32 %v1325, %v1335
        %v1338 = vsub.f32 %v1326, %v1336
        %v1339 = vmul.f32 %v1337, %v1337
        %v1340 = vmul.f32 %v1338, %v1338
        %v1341 = vsel %vm907, %v1339, 0.0
        %1342 = vadd.xlane.f32.xlu0 %v1341
        %v1343 = vpop.xlane.xlu0 %1342
        %v1344 = vsel %vm907, %v1340, 0.0
        %1345 = vadd.xlane.f32.xlu0 %v1344
        %v1346 = vpop.xlane.xlu0 %1345
        %v1347 = vmul.f32 %v1343, %v914
        %v1348 = vmul.f32 %v1346, %v914
        %v1349 = vadd.f32 %v1347, 1e-05
        %v1350 = vadd.f32 %v1348, 1e-05
        %v1351 = vrsqrt.pop %v1349
        %v1352 = vrsqrt.pop %v1350
        %v1353 = vmul.f32 %v1337, %v1351
        %v1354 = vmul.f32 %v1338, %v1352
        %v1356 = vlaneseq
        %v1357 = vshrl.u32 %v1356, 7
        %v1358 = vsub.s32 0, %v1357
        %v1359 = vrot.slane %v1327, %v1358
        %v1361 = vmul.f32 %v1353, %v1359
        %v1362 = vmul.f32 %v1354, %v1359
        %v1364 = vlaneseq
        %v1365 = vshrl.u32 %v1364, 7
        %v1366 = vsub.s32 0, %v1365
        %v1367 = vrot.slane %v1328, %v1366
        %v1369 = vadd.f32 %v1361, %v1367
        %v1370 = vadd.f32 %v1362, %v1367
        %v1371 = vpack.c.bf16 %v1370, %v1369
        %v1372 = vld [vmem:[%s770] sm:$0xff]
        %v1373 = vld [vmem:[%s770 + $0x8] sm:$0xff]
        %v1374 = vld [vmem:[%s770 + $0x10] sm:$0xff]
        %v1375 = vld [vmem:[%s770 + $0x18] sm:$0xff]
        %v1376 = vld [vmem:[%s770 + $0x20] sm:$0xff]
        %v1377 = vld [vmem:[%s770 + $0x28] sm:$0xff]
        %v1378 = vld [vmem:[%s770 + $0x30] sm:$0xff]
        %v1379 = vld [vmem:[%s770 + $0x38] sm:$0xff]
        %v1380 = vld [vmem:[%s779] sm:$0x3]
        %v1382 = vlaneseq
        %v1383 = vshrl.u32 %v1382, 7
        %v1384 = vsub.s32 0, %v1383
        %v1385 = vrot.slane %v1380, %v1384
        %v1386 = vlaneseq
        %v1387 = vshrl.u32 %v1386, 7
        %v1388 = vsub.s32 1, %v1387
        %v1389 = vrot.slane %v1380, %v1388
        %v1400 = vunpack.c.l.b16 %v1372
        %v1401 = vunpack.c.h.b16 %v1372
        %v1402 = vunpack.c.l.b16 %v1373
        %v1403 = vunpack.c.h.b16 %v1373
        %v1404 = vunpack.c.l.b16 %v1374
        %v1405 = vunpack.c.h.b16 %v1374
        %v1406 = vunpack.c.l.b16 %v1375
        %v1407 = vunpack.c.h.b16 %v1375
        %v1408 = vunpack.c.l.b16 %v1376
        %v1409 = vunpack.c.h.b16 %v1376
        %v1410 = vunpack.c.l.b16 %v1377
        %v1411 = vunpack.c.h.b16 %v1377
        %v1412 = vunpack.c.l.b16 %v1378
        %v1413 = vunpack.c.h.b16 %v1378
        %v1414 = vunpack.c.l.b16 %v1379
        %v1415 = vunpack.c.h.b16 %v1379
        %v1416 = vpack.c.b16 %v1402, %v1400
        %v1417 = vpack.c.b16 %v1403, %v1401
        %v1418 = vpack.c.b16 %v1406, %v1404
        %v1419 = vpack.c.b16 %v1407, %v1405
        %v1420 = vpack.c.b16 %v1410, %v1408
        %v1421 = vpack.c.b16 %v1411, %v1409
        %v1422 = vpack.c.b16 %v1414, %v1412
        %v1423 = vpack.c.b16 %v1415, %v1413
        %v1433 = vsel %vm907, %v1371, 0
        %1435 = vmatprep.subr.bf16.mxu0 %v1417
        %1436 = vmatpush1.bf16.msra.mxu0 %v1416
        %1437 = vmatprep.subr.bf16.mxu0 %v1419
        %1438 = vmatpush1.bf16.msra.mxu0 %v1418
        %1439 = vmatprep.subr.bf16.mxu0 %v1421
        %1440 = vmatpush1.bf16.msra.mxu0 %v1420
        %1441 = vmatprep.subr.bf16.mxu0 %v1423
        %1442 = vmatpush1.bf16.msra.mxu0 %v1422
        %1443 = vmatprep.subr.bf16.mxu0 0
        %1444 = vmatpush1.bf16.msra.mxu0 0
        %1445 = vmatprep.subr.bf16.mxu0 0
        %1446 = vmatpush1.bf16.msra.mxu0 0
        %1447 = vmatprep.subr.bf16.mxu0 0
        %1448 = vmatpush1.bf16.msra.mxu0 0
        %1449 = vmatprep.subr.bf16.mxu0 0
        %1450 = vmatpush1.bf16.msra.mxu0 0
        %1451 = vmatprep.subr.bf16.mxu0 0
        %1452 = vmatpush1.bf16.msra.mxu0 0
        %1453 = vmatprep.subr.bf16.mxu0 0
        %1454 = vmatpush1.bf16.msra.mxu0 0
        %1455 = vmatprep.subr.bf16.mxu0 0
        %1456 = vmatpush1.bf16.msra.mxu0 0
        %1457 = vmatprep.subr.bf16.mxu0 0
        %1458 = vmatpush1.bf16.msra.mxu0 0
        %1459 = vmatprep.subr.bf16.mxu0 0
        %1460 = vmatpush1.bf16.msra.mxu0 0
        %1461 = vmatprep.subr.bf16.mxu0 0
        %1462 = vmatpush1.bf16.msra.mxu0 0
        %1463 = vmatprep.subr.bf16.mxu0 0
        %1464 = vmatpush1.bf16.msra.mxu0 0
        %1465 = vmatprep.subr.bf16.mxu0 0
        %1466 = vmatpush1.bf16.msra.mxu0 0
        %1467 = vmatprep.mubr.bf16.mxu0 0
        %1468 = vmatmul.mubr.bf16.gmra.mrb[0].mxu0 %v1433
        %v1469 = vpop.f32.mrb[0].mxu0
        %v1470 = vadd.f32 %v1385, %v1469
        %v1471 = vpop.f32.mrb[0].mxu0
        %v1472 = vadd.f32 %v1389, %v1471
        %v1473 = vpop.f32.mrb[0].mxu0
        %v1474 = vadd.f32 %v1385, %v1473
        %v1475 = vpop.f32.mrb[0].mxu0
        %v1476 = vadd.f32 %v1389, %v1475
        %1477 = vdwg.mxu0
        %v1478 = vmul.f32 %v1470, 0.5
        %v1479 = vmul.f32 %v1472, 0.5
        %v1480 = vmul.f32 %v1474, 0.5
        %v1481 = vmul.f32 %v1476, 0.5
        %v1482 = vmul.f32 %v1470, 0.044715
        %v1483 = vmul.f32 %v1472, 0.044715
        %v1484 = vmul.f32 %v1474, 0.044715
        %v1485 = vmul.f32 %v1476, 0.044715
        %v1486 = vmul.f32 %v1482, %v1470
        %v1487 = vmul.f32 %v1483, %v1472
        %v1488 = vmul.f32 %v1484, %v1474
        %v1489 = vmul.f32 %v1485, %v1476
        %v1490 = vmul.f32 %v1486, %v1470
        %v1491 = vmul.f32 %v1487, %v1472
        %v1492 = vmul.f32 %v1488, %v1474
        %v1493 = vmul.f32 %v1489, %v1476
        %v1494 = vadd.f32 %v1470, %v1490
        %v1495 = vadd.f32 %v1472, %v1491
        %v1496 = vadd.f32 %v1474, %v1492
        %v1497 = vadd.f32 %v1476, %v1493
        %v1498 = vmul.f32 %v1494, 0.7978846
        %v1499 = vmul.f32 %v1495, 0.7978846
        %v1500 = vmul.f32 %v1496, 0.7978846
        %v1501 = vmul.f32 %v1497, 0.7978846
        %v1502 = vtanh.pop %v1498
        %v1503 = vtanh.pop %v1499
        %v1504 = vtanh.pop %v1500
        %v1505 = vtanh.pop %v1501
        %v1506 = vadd.f32 %v1502, 1.0
        %v1507 = vadd.f32 %v1503, 1.0
        %v1508 = vadd.f32 %v1504, 1.0
        %v1509 = vadd.f32 %v1505, 1.0
        %v1510 = vmul.f32 %v1478, %v1506
        %v1511 = vmul.f32 %v1479, %v1507
        %v1512 = vmul.f32 %v1480, %v1508
        %v1513 = vmul.f32 %v1481, %v1509
        %v1514 = vpack.c.bf16 %v1512, %v1510
        %v1515 = vpack.c.bf16 %v1513, %v1511
        %v1516 = vld [vmem:[%s788] sm:$0xf]
        %v1517 = vld [vmem:[%s788 + $0x4] sm:$0xf]
        %v1518 = vld [vmem:[%s788 + $0x8] sm:$0xf]
        %v1519 = vld [vmem:[%s788 + $0xc] sm:$0xf]
        %v1520 = vld [vmem:[%s788 + $0x10] sm:$0xf]
        %v1521 = vld [vmem:[%s788 + $0x14] sm:$0xf]
        %v1522 = vld [vmem:[%s788 + $0x18] sm:$0xf]
        %v1523 = vld [vmem:[%s788 + $0x1c] sm:$0xf]
        %v1524 = vld [vmem:[%s788 + $0x20] sm:$0xf]
        %v1525 = vld [vmem:[%s788 + $0x24] sm:$0xf]
        %v1526 = vld [vmem:[%s788 + $0x28] sm:$0xf]
        %v1527 = vld [vmem:[%s788 + $0x2c] sm:$0xf]
        %v1528 = vld [vmem:[%s788 + $0x30] sm:$0xf]
        %v1529 = vld [vmem:[%s788 + $0x34] sm:$0xf]
        %v1530 = vld [vmem:[%s788 + $0x38] sm:$0xf]
        %v1531 = vld [vmem:[%s788 + $0x3c] sm:$0xf]
        %v1532 = vld [vmem:[%s788 + $0x40] sm:$0xf]
        %v1533 = vld [vmem:[%s788 + $0x44] sm:$0xf]
        %v1534 = vld [vmem:[%s788 + $0x48] sm:$0xf]
        %v1535 = vld [vmem:[%s788 + $0x4c] sm:$0xf]
        %v1536 = vld [vmem:[%s788 + $0x50] sm:$0xf]
        %v1537 = vld [vmem:[%s788 + $0x54] sm:$0xf]
        %v1538 = vld [vmem:[%s788 + $0x58] sm:$0xf]
        %v1539 = vld [vmem:[%s788 + $0x5c] sm:$0xf]
        %v1540 = vld [vmem:[%s788 + $0x60] sm:$0xf]
        %v1541 = vld [vmem:[%s788 + $0x64] sm:$0xf]
        %v1542 = vld [vmem:[%s788 + $0x68] sm:$0xf]
        %v1543 = vld [vmem:[%s788 + $0x6c] sm:$0xf]
        %v1544 = vld [vmem:[%s788 + $0x70] sm:$0xf]
        %v1545 = vld [vmem:[%s788 + $0x74] sm:$0xf]
        %v1546 = vld [vmem:[%s788 + $0x78] sm:$0xf]
        %v1547 = vld [vmem:[%s788 + $0x7c] sm:$0xf]
        %v1548 = vld [vmem:[%s796] sm:$0x1]
        %v1550 = vlaneseq
        %v1551 = vshrl.u32 %v1550, 7
        %v1552 = vsub.s32 0, %v1551
        %v1553 = vrot.slane %v1548, %v1552
        %v1587 = vunpack.c.l.b16 %v1516
        %v1588 = vunpack.c.l.b16 %v1517
        %v1589 = vunpack.c.l.b16 %v1518
        %v1590 = vunpack.c.l.b16 %v1519
        %v1591 = vunpack.c.l.b16 %v1520
        %v1592 = vunpack.c.l.b16 %v1521
        %v1593 = vunpack.c.l.b16 %v1522
        %v1594 = vunpack.c.l.b16 %v1523
        %v1595 = vunpack.c.l.b16 %v1524
        %v1596 = vunpack.c.l.b16 %v1525
        %v1597 = vunpack.c.l.b16 %v1526
        %v1598 = vunpack.c.l.b16 %v1527
        %v1599 = vunpack.c.l.b16 %v1528
        %v1600 = vunpack.c.l.b16 %v1529
        %v1601 = vunpack.c.l.b16 %v1530
        %v1602 = vunpack.c.l.b16 %v1531
        %v1603 = vunpack.c.l.b16 %v1532
        %v1604 = vunpack.c.l.b16 %v1533
        %v1605 = vunpack.c.l.b16 %v1534
        %v1606 = vunpack.c.l.b16 %v1535
        %v1607 = vunpack.c.l.b16 %v1536
        %v1608 = vunpack.c.l.b16 %v1537
        %v1609 = vunpack.c.l.b16 %v1538
        %v1610 = vunpack.c.l.b16 %v1539
        %v1611 = vunpack.c.l.b16 %v1540
        %v1612 = vunpack.c.l.b16 %v1541
        %v1613 = vunpack.c.l.b16 %v1542
        %v1614 = vunpack.c.l.b16 %v1543
        %v1615 = vunpack.c.l.b16 %v1544
        %v1616 = vunpack.c.l.b16 %v1545
        %v1617 = vunpack.c.l.b16 %v1546
        %v1618 = vunpack.c.l.b16 %v1547
        %v1619 = vpack.c.b16 %v1588, %v1587
        %v1620 = vpack.c.b16 %v1590, %v1589
        %v1621 = vpack.c.b16 %v1592, %v1591
        %v1622 = vpack.c.b16 %v1594, %v1593
        %v1623 = vpack.c.b16 %v1596, %v1595
        %v1624 = vpack.c.b16 %v1598, %v1597
        %v1625 = vpack.c.b16 %v1600, %v1599
        %v1626 = vpack.c.b16 %v1602, %v1601
        %v1627 = vpack.c.b16 %v1604, %v1603
        %v1628 = vpack.c.b16 %v1606, %v1605
        %v1629 = vpack.c.b16 %v1608, %v1607
        %v1630 = vpack.c.b16 %v1610, %v1609
        %v1631 = vpack.c.b16 %v1612, %v1611
        %v1632 = vpack.c.b16 %v1614, %v1613
        %v1633 = vpack.c.b16 %v1616, %v1615
        %v1634 = vpack.c.b16 %v1618, %v1617
        %1651 = vmatprep.subr.bf16.mxu0 0
        %1652 = vmatpush1.bf16.msra.mxu0 %v1619
        %1653 = vmatprep.subr.bf16.mxu0 0
        %1654 = vmatpush1.bf16.msra.mxu0 %v1620
        %1655 = vmatprep.subr.bf16.mxu0 0
        %1656 = vmatpush1.bf16.msra.mxu0 %v1621
        %1657 = vmatprep.subr.bf16.mxu0 0
        %1658 = vmatpush1.bf16.msra.mxu0 %v1622
        %1659 = vmatprep.subr.bf16.mxu0 0
        %1660 = vmatpush1.bf16.msra.mxu0 %v1623
        %1661 = vmatprep.subr.bf16.mxu0 0
        %1662 = vmatpush1.bf16.msra.mxu0 %v1624
        %1663 = vmatprep.subr.bf16.mxu0 0
        %1664 = vmatpush1.bf16.msra.mxu0 %v1625
        %1665 = vmatprep.subr.bf16.mxu0 0
        %1666 = vmatpush1.bf16.msra.mxu0 %v1626
        %1667 = vmatprep.subr.bf16.mxu0 0
        %1668 = vmatpush1.bf16.msra.mxu0 %v1627
        %1669 = vmatprep.subr.bf16.mxu0 0
        %1670 = vmatpush1.bf16.msra.mxu0 %v1628
        %1671 = vmatprep.subr.bf16.mxu0 0
        %1672 = vmatpush1.bf16.msra.mxu0 %v1629
        %1673 = vmatprep.subr.bf16.mxu0 0
        %1674 = vmatpush1.bf16.msra.mxu0 %v1630
        %1675 = vmatprep.subr.bf16.mxu0 0
        %1676 = vmatpush1.bf16.msra.mxu0 %v1631
        %1677 = vmatprep.subr.bf16.mxu0 0
        %1678 = vmatpush1.bf16.msra.mxu0 %v1632
        %1679 = vmatprep.subr.bf16.mxu0 0
        %1680 = vmatpush1.bf16.msra.mxu0 %v1633
        %1681 = vmatprep.subr.bf16.mxu0 0
        %1682 = vmatpush1.bf16.msra.mxu0 %v1634
        %1683 = vmatprep.mubr.bf16.mxu0 %v1515
        %1684 = vmatmul.mubr.bf16.gmra.mrb[0].mxu0 %v1514
        %v1685 = vpop.f32.mrb[0].mxu0
        %v1686 = vadd.f32 %v1553, %v1685
        %v1687 = vpop.f32.mrb[0].mxu0
        %v1688 = vpop.f32.mrb[0].mxu0
        %v1689 = vadd.f32 %v1553, %v1688
        %v1690 = vpop.f32.mrb[0].mxu0
        %1691 = vdwg.mxu0
        %v1692 = vadd.f32 %v1325, %v1686
        %v1693 = vadd.f32 %v1326, %v1689
        %1694 = vst.msk [vmem:[%s892] sm:$0xff] %vm907, %v1692
        %1695 = vst.msk [vmem:[%s892 + $0x8] sm:$0xff] %vm907, %v1693
        %s1696 = sand.u32 %s406, 1
        %s1697 = scalar_lea.sflag [#allocation7], %s1696
        %s1698 = sand.u32 %s406, 1
        %s1699 = smul.addr %s1698, 16
        %s1700 = scalar_lea.vmem [#allocation26], %s1699
        // Predicated region
        $region136: #{tpu_custom_call.1} parent=71 // pred_check
          %p1701 = pneg %p416
        $region137: #{tpu_custom_call.1} parent=71 // pred_check_branch
          %1703 = sbr.rel (%p1701) target = $region139
        $region138: #{tpu_custom_call.1} parent=71 // pred_region
          %s1705 = ssub.s32 256, 256
          %1706 = vsyncadd %s1697, %s1705
          %s1707 = smul.addr %s52, 2
          %s1708 = smul.addr %s1707, 128
          %s1709 = scalar_lea.hbm %s13, %s1708
          %s1710 = sshll.u32 %s1700, 4
          %s1711 = int_to_ptr.vmem [resolvable:$true] %s1710
          %1716 = dma.vmem_to_hbm [thread:$0]  %s1711, 256, %s1709, %s1697, 128, 128, 8
        $region139: #{tpu_custom_call.1} parent=71 // pred_fallthru
          _
      $region72: #{tpu_custom_call.1} parent=5 // pred_fallthru
        _
      %p1717 = scmp.le.s32.totalorder 2, %s43
      // Predicated region
      $region140: #{tpu_custom_call.1} parent=5 // pred_check
        %p1718 = pneg %p1717
      $region141: #{tpu_custom_call.1} parent=5 // pred_check_branch
        %1720 = sbr.rel (%p1718) target = $region143
      $region142: #{tpu_custom_call.1} parent=5 // pred_region
        %s1721 = ssub.s32 %s43, 2
        // Predicated region
        $region144: #{tpu_custom_call.1} parent=142 // pred_check
          %p1722 = pneg %p422
        $region145: #{tpu_custom_call.1} parent=142 // pred_check_branch
          %1724 = sbr.rel (%p1722) target = $region147
        $region146: #{tpu_custom_call.1} parent=142 // pred_region
          %s1725 = sand.u32 %s407, 1
          %s1726 = scalar_lea.sflag [#allocation7], %s1725
          %s1727 = sand.u32 %s407, 1
          %s1728 = smul.addr %s1727, 16
          %s1729 = scalar_lea.vmem [#allocation26], %s1728
          %1730 = dma.done %s1726, 256
        $region147: #{tpu_custom_call.1} parent=142 // pred_fallthru
          _
      $region143: #{tpu_custom_call.1} parent=5 // pred_fallthru
        _
    $region6: #{tpu_custom_call.1} parent=1 // loop_footer
      %s47 = sadd.s32 1, %s43
    $region7: #{tpu_custom_call.1} parent=1 // loop_footer_branch
      %42 = sbr.rel target = $region3
    $region8: #{tpu_custom_call.1} parent=1 // loop_exit
      _
    %1731 = vsyncpa [#allocation6], 1
    %s1732 = scalar_lea.sflag [#allocation6], 1
    %1733 = vsyncpa %s1732, 1
    %1734 = vsyncpa [#allocation9], 1
    %s1735 = scalar_lea.sflag [#allocation9], 1
    %1736 = vsyncpa %s1735, 1
    %1737 = vsyncpa [#allocation12], 1
    %s1738 = scalar_lea.sflag [#allocation12], 1
    %1739 = vsyncpa %s1738, 1
    %1740 = vsyncpa [#allocation15], 1
    %s1741 = scalar_lea.sflag [#allocation15], 1
    %1742 = vsyncpa %s1741, 1
    %1743 = vsyncpa [#allocation18], 1
    %s1744 = scalar_lea.sflag [#allocation18], 1
    %1745 = vsyncpa %s1744, 1
    %1746 = vsyncpa [#allocation21], 1
    %s1747 = scalar_lea.sflag [#allocation21], 1
    %1748 = vsyncpa %s1747, 1
    %1749 = vsyncpa [#allocation24], 1
    %s1750 = scalar_lea.sflag [#allocation24], 1
    %1751 = vsyncpa %s1750, 1
    %1752 = vsyncpa [#allocation7], 1
    %s1753 = scalar_lea.sflag [#allocation7], 1
    %1754 = vsyncpa %s1753, 1

</llo_original>
